<compile_context>
chip_gen: v5e
topology: v5e:2x2
jax: 0.10.0
libtpu: 0.0.40
codegen_flags: <defaults>
</compile_context>

<pallas_src>
import math

import jax
import jax.numpy as jnp
from jax import lax
from jax.experimental import pallas as pl
from jax.experimental.pallas import tpu as pltpu

EMBEDDING_SIZE = 64
NUM_HEADS = 8
HEAD_SIZE = EMBEDDING_SIZE // NUM_HEADS
LN_EPS = 1e-5
LEAKY_SLOPE = 0.01  # PyTorch nn.LeakyReLU default


def decoder_block_kernel(x_ref,
                         wqkv_ref, bqkv_ref,
                         wp_ref, bp_ref,
                         g_ref, beta_ref,
                         w1_ref, b1_ref, w2_ref, b2_ref,
                         o_ref):
    Bt, S, E = x_ref.shape
    M = Bt * S
    H, hs = NUM_HEADS, HEAD_SIZE
    bf16 = jnp.bfloat16

    x = x_ref[...].reshape(M, E)                       # (M, E) float32

    # --- fused QKV projection: one MXU call, bf16 in / f32 accumulate -------
    qkv = jnp.dot(x.astype(bf16), wqkv_ref[...],
                  preferred_element_type=jnp.float32) + bqkv_ref[...]   # (M, 3E)

    # q stays row-major; fold 1/sqrt(head_size) into q before the score dot.
    q_bf = (qkv[:, :E] * (1.0 / math.sqrt(hs))).astype(bf16)            # (M, E)
    # K and V transposed once (fused): per-head slices become aligned sublane
    # slabs and q @ k^T needs no per-head transpose at all.
    kvT = qkv[:, E:].T                                                  # (2E, M)
    k_bf = kvT[:E].astype(bf16)                                         # (E, M)
    v_bf = kvT[E:].astype(bf16)                                         # (E, M)

    # Causal mask over the flattened (M, M) score matrix; when several batch
    # elements share a block, also forbid cross-batch attention
    # (block-diagonal mask).  Finite fill value instead of -inf.
    row = lax.broadcasted_iota(jnp.int32, (M, M), 0)
    col = lax.broadcasted_iota(jnp.int32, (M, M), 1)
    valid = col <= row
    if Bt > 1:
        s_row = jnp.tile(lax.broadcasted_iota(jnp.int32, (S, M), 0), (Bt, 1))
        s_col = jnp.tile(lax.broadcasted_iota(jnp.int32, (M, S), 1), (1, Bt))
        valid = valid & ((row - s_row) == (col - s_col))  # same batch element

    # dot_general contracting the last dim of both operands ("n-t" matmul).
    nt_dims = (((1,), (1,)), ((), ()))

    head_outs = []
    for h in range(H):                    # static; one MXU dot per head, each
        lo = h * hs                       # spanning all M = block_b*S rows
        qh = q_bf[:, lo:lo + hs]          # (M, hs)
        kh = k_bf[lo:lo + hs]             # (hs, M) sublane slab (k already ^T)
        vh = v_bf[lo:lo + hs]             # (hs, M) sublane slab
        sc = jnp.dot(qh, kh, preferred_element_type=jnp.float32)     # (M, M)
        sc = jnp.where(valid, sc, -1e30)
        smax = jnp.max(sc, axis=-1, keepdims=True)
        p = jnp.exp(sc - smax)
        p = p * pl.reciprocal(jnp.sum(p, axis=-1, keepdims=True), approx=True)
        # out_h^T = v_h^T @ p^T -> (hs, M): keeps the head concat on sublanes.
        head_outs.append(
            lax.dot_general(vh, p.astype(bf16), nt_dims,
                            preferred_element_type=jnp.float32))
    attn_t = jnp.concatenate(head_outs, axis=0)        # (E, M), sublane concat
    attn = attn_t.T                                    # (M, E), one 2D transpose

    # output projection (+ dropout == identity in eval)
    attn = jnp.dot(attn.astype(bf16), wp_ref[...],
                   preferred_element_type=jnp.float32) + bp_ref[...]

    # residual 1
    x1 = attn + x

    # --- LayerNorm over last dim (biased variance, eps=1e-5), f32 -----------
    mu = jnp.mean(x1, axis=-1, keepdims=True)
    xc = x1 - mu
    var = jnp.mean(xc * xc, axis=-1, keepdims=True)
    xn = xc * lax.rsqrt(var + LN_EPS)
    xn = xn * g_ref[...] + beta_ref[...]

    # --- FeedForward: Linear(E,4E) -> LeakyReLU -> Linear(4E,E) -------------
    h1 = jnp.dot(xn.astype(bf16), w1_ref[...],
                 preferred_element_type=jnp.float32) + b1_ref[...]
    h1 = jnp.where(h1 > 0, h1, LEAKY_SLOPE * h1)
    h2 = jnp.dot(h1.astype(bf16), w2_ref[...],
                 preferred_element_type=jnp.float32) + b2_ref[...]

    # residual 2
    o_ref[...] = (h2 + xn).reshape(Bt, S, E).astype(o_ref.dtype)


def _pick_block_b(B, S, max_rows=128):
    """Fold batch elements into one grid step to fill the matmul M dimension
    (<= max_rows rows) while keeping >= 2 grid steps when B allows it
    (v7x has 2 TensorCores; the parallel grid axis is sharded across them)."""
    cap = max(1, max_rows // S)
    if B >= 2:
        cap = min(cap, max(1, B // 2))
    best = 1
    for cand in range(1, min(cap, B) + 1):
        if B % cand == 0:
            best = cand
    return best


def _cost_estimate(B, S, E, block_b):
    M = block_b * S
    steps = B // block_b
    H, hs = NUM_HEADS, HEAD_SIZE
    per_step_flops = (2 * M * E * 3 * E            # fused QKV projection
                      + 2 * H * M * M * hs * 2     # scores + PV ((M,M) per head)
                      + 2 * M * E * E              # output projection
                      + 2 * M * E * 4 * E * 2)     # FFN up + down
    weight_bytes = (2 * (3 * E * E + E * E + 8 * E * E)          # bf16 weights
                    + 4 * (3 * E + E + 2 * E + 4 * E + E))       # f32 biases/LN
    return pl.CostEstimate(
        flops=steps * per_step_flops,
        transcendentals=steps * (H * M * M + 2 * M),
        bytes_accessed=2 * B * S * E * 4 + weight_bytes)


def decoder_block(x, prep, *, block_b=None):
    """x: (B, S, E) float32. prep: output of prepare_params()."""
    B, S, E = x.shape
    assert E == EMBEDDING_SIZE
    if block_b is None:
        block_b = _pick_block_b(B, S)
    assert B % block_b == 0, "block_b must divide the batch size"

    names = ["wqkv", "bqkv", "wp", "bp", "gamma", "beta", "w1", "b1", "w2", "b2"]
    weights = [prep[n] for n in names]

    def full2d(a):
        return pl.BlockSpec(a.shape, lambda i: (0, 0))

    in_specs = [pl.BlockSpec((block_b, S, E), lambda i: (i, 0, 0))]
    in_specs += [full2d(w) for w in weights]

    return pl.pallas_call(
        decoder_block_kernel,
        out_shape=jax.ShapeDtypeStruct((B, S, E), x.dtype),
        grid_spec=pltpu.PrefetchScalarGridSpec(
            num_scalar_prefetch=0,
            grid=(B // block_b,),
            in_specs=in_specs,
            out_specs=pl.BlockSpec((block_b, S, E), lambda i: (i, 0, 0)),
        ),
        compiler_params=pltpu.CompilerParams(
            dimension_semantics=("parallel",)),
        cost_estimate=_cost_estimate(B, S, E, block_b),
    )(x, *weights)


def init_params(key):
    """Deterministic synthetic parameters. Linear weights stored (in, out);
    biases stored as (1, out) rows for clean 2D VMEM layout."""
    E = EMBEDDING_SIZE
    ks = jax.random.split(key, 8)
    scale = 0.02

    def lin(k, din, dout):
        kw, kb = jax.random.split(k)
        w = scale * jax.random.normal(kw, (din, dout), jnp.float32)
        b = scale * jax.random.normal(kb, (1, dout), jnp.float32)
        return w, b

    wq, bq = lin(ks[0], E, E)       # concatenated per-head query projections
    wk, bk = lin(ks[1], E, E)
    wv, bv = lin(ks[2], E, E)
    wp, bp = lin(ks[3], E, E)       # MultiHeadAttention.projection
    w1, b1 = lin(ks[4], E, 4 * E)   # FFN first Linear
    w2, b2 = lin(ks[5], 4 * E, E)   # FFN second Linear
    gamma = jnp.ones((1, E), jnp.float32)   # nn.LayerNorm default init
    beta = jnp.zeros((1, E), jnp.float32)
    return dict(wq=wq, bq=bq, wk=wk, bk=bk, wv=wv, bv=bv,
                wp=wp, bp=bp, gamma=gamma, beta=beta,
                w1=w1, b1=b1, w2=w2, b2=b2)


def prepare_params(params):
    """One-time packing for the kernel: fuse wq|wk|wv into a single (E, 3E)
    weight, store matmul weights in bfloat16 (f32 accumulation in-kernel),
    keep biases / LayerNorm params in float32."""
    bf16, f32 = jnp.bfloat16, jnp.float32
    wqkv = jnp.concatenate([params["wq"], params["wk"], params["wv"]], axis=1)
    bqkv = jnp.concatenate([params["bq"], params["bk"], params["bv"]], axis=1)
    return dict(
        wqkv=wqkv.astype(bf16), bqkv=bqkv.astype(f32),
        wp=params["wp"].astype(bf16), bp=params["bp"].astype(f32),
        gamma=params["gamma"].astype(f32), beta=params["beta"].astype(f32),
        w1=params["w1"].astype(bf16), b1=params["b1"].astype(f32),
        w2=params["w2"].astype(bf16), b2=params["b2"].astype(f32),
    )


def decoder_block_ref(x, p):
    """Pure-JAX float32 reference (PyTorch-faithful) for a sanity check."""
    q = x @ p["wq"] + p["bq"][0]
    k = x @ p["wk"] + p["bk"][0]
    v = x @ p["wv"] + p["bv"][0]
    B, S, E = x.shape
    qh = q.reshape(B, S, NUM_HEADS, HEAD_SIZE).transpose(0, 2, 1, 3)
    kh = k.reshape(B, S, NUM_HEADS, HEAD_SIZE).transpose(0, 2, 1, 3)
    vh = v.reshape(B, S, NUM_HEADS, HEAD_SIZE).transpose(0, 2, 1, 3)
    s = jnp.einsum("bhqd,bhkd->bhqk", qh, kh) / math.sqrt(HEAD_SIZE)
    mask = jnp.tril(jnp.ones((S, S), bool))
    s = jnp.where(mask, s, -jnp.inf)
    w = jax.nn.softmax(s, axis=-1)
    o = jnp.einsum("bhqk,bhkd->bhqd", w, vh).transpose(0, 2, 1, 3).reshape(B, S, E)
    o = o @ p["wp"] + p["bp"][0]
    x1 = o + x
    mu = x1.mean(-1, keepdims=True)
    var = ((x1 - mu) ** 2).mean(-1, keepdims=True)
    xn = (x1 - mu) / jnp.sqrt(var + LN_EPS) * p["gamma"][0] + p["beta"][0]
    h1 = xn @ p["w1"] + p["b1"][0]
    h1 = jnp.where(h1 > 0, h1, LEAKY_SLOPE * h1)
    h2 = h1 @ p["w2"] + p["b2"][0]
    return h2 + xn


if __name__ == "__main__":
    key = jax.random.PRNGKey(0)
    kx, kp = jax.random.split(key)
    params = init_params(kp)
    prep = prepare_params(params)

    # Small shape (block_b=1, 2 grid steps) plus a larger batch that exercises
    # block_b > 1 (several batch elements folded into one grid step).
    for i, (B, S) in enumerate(((2, 16), (16, 16))):
        x = jax.random.normal(jax.random.fold_in(kx, i),
                              (B, S, EMBEDDING_SIZE), jnp.float32)
        out = jax.block_until_ready(decoder_block(x, prep))
        ref = decoder_block_ref(x, params)
        assert out.shape == (B, S, EMBEDDING_SIZE)
        # bf16 matmul operands + approximate reciprocal vs. an all-f32 reference.
        err = jnp.max(jnp.abs(out - ref))
        assert jnp.allclose(out, ref, atol=5e-3, rtol=5e-3), (
            f"mismatch vs reference (max abs err {err})")

    print("KERNEL_OK")
</pallas_src>

<mosaic_0001>
module attributes {stable_mosaic.version = 11 : i64} {
  func.func @decoder_block_kernel(%arg0: i32, %arg1: memref<1x16x64xf32, #tpu.memory_space<vmem>>, %arg2: memref<64x192xbf16, #tpu.memory_space<vmem>>, %arg3: memref<1x192xf32, #tpu.memory_space<vmem>>, %arg4: memref<64x64xbf16, #tpu.memory_space<vmem>>, %arg5: memref<1x64xf32, #tpu.memory_space<vmem>>, %arg6: memref<1x64xf32, #tpu.memory_space<vmem>>, %arg7: memref<1x64xf32, #tpu.memory_space<vmem>>, %arg8: memref<64x256xbf16, #tpu.memory_space<vmem>>, %arg9: memref<1x256xf32, #tpu.memory_space<vmem>>, %arg10: memref<256x64xbf16, #tpu.memory_space<vmem>>, %arg11: memref<1x64xf32, #tpu.memory_space<vmem>>, %arg12: memref<1x16x64xf32, #tpu.memory_space<vmem>>) attributes {dimension_semantics = [#tpu.dimension_semantics<parallel>], iteration_bounds = array<i64: 2>, scalar_prefetch = 0 : i64, scratch_operands = 0 : i64, tpu.core_type = #tpu.core_type<tc>, window_params = [{transform_indices = @transform_0, window_bounds = array<i64: 1, 16, 64>}, {pipeline_mode = #tpu.pipeline_mode<synchronous>, transform_indices = @transform_1, window_bounds = array<i64: 64, 192>}, {pipeline_mode = #tpu.pipeline_mode<synchronous>, transform_indices = @transform_2, window_bounds = array<i64: 1, 192>}, {pipeline_mode = #tpu.pipeline_mode<synchronous>, transform_indices = @transform_3, window_bounds = array<i64: 64, 64>}, {pipeline_mode = #tpu.pipeline_mode<synchronous>, transform_indices = @transform_4, window_bounds = array<i64: 1, 64>}, {pipeline_mode = #tpu.pipeline_mode<synchronous>, transform_indices = @transform_5, window_bounds = array<i64: 1, 64>}, {pipeline_mode = #tpu.pipeline_mode<synchronous>, transform_indices = @transform_6, window_bounds = array<i64: 1, 64>}, {pipeline_mode = #tpu.pipeline_mode<synchronous>, transform_indices = @transform_7, window_bounds = array<i64: 64, 256>}, {pipeline_mode = #tpu.pipeline_mode<synchronous>, transform_indices = @transform_8, window_bounds = array<i64: 1, 256>}, {pipeline_mode = #tpu.pipeline_mode<synchronous>, transform_indices = @transform_9, window_bounds = array<i64: 256, 64>}, {pipeline_mode = #tpu.pipeline_mode<synchronous>, transform_indices = @transform_10, window_bounds = array<i64: 1, 64>}, {transform_indices = @transform_11, window_bounds = array<i64: 1, 16, 64>}]} {
    %c0 = arith.constant 0 : index
    %c0_0 = arith.constant 0 : index
    %c0_1 = arith.constant 0 : index
    %0 = vector.load %arg1[%c0, %c0_0, %c0_1] : memref<1x16x64xf32, #tpu.memory_space<vmem>>, vector<1x16x64xf32>
    %1 = vector.shape_cast %0 : vector<1x16x64xf32> to vector<16x64xf32>
    %2 = arith.truncf %1 : vector<16x64xf32> to vector<16x64xbf16>
    %c0_2 = arith.constant 0 : index
    %c0_3 = arith.constant 0 : index
    %3 = vector.load %arg2[%c0_2, %c0_3] : memref<64x192xbf16, #tpu.memory_space<vmem>>, vector<64x192xbf16>
    %cst = arith.constant dense<0.000000e+00> : vector<16x192xf32>
    %4 = tpu.matmul %2, %3, %cst {dimension_numbers = #tpu.dot_dimension_numbers<[1], [0], [0], [1], [0, 0, 1, 1], [], []>} : vector<16x64xbf16>, vector<64x192xbf16>, vector<16x192xf32> -> vector<16x192xf32>
    %c0_4 = arith.constant 0 : index
    %c0_5 = arith.constant 0 : index
    %5 = vector.load %arg3[%c0_4, %c0_5] : memref<1x192xf32, #tpu.memory_space<vmem>>, vector<1x192xf32>
    %6 = vector.broadcast %5 : vector<1x192xf32> to vector<16x192xf32>
    %7 = arith.addf %4, %6 : vector<16x192xf32>
    %8 = vector.extract_strided_slice %7 {offsets = [0, 0], sizes = [16, 64], strides = [1, 1]} : vector<16x192xf32> to vector<16x64xf32>
    %cst_6 = arith.constant 0.353553385 : f32
    %9 = vector.broadcast %cst_6 : f32 to vector<16x64xf32>
    %10 = arith.mulf %8, %9 : vector<16x64xf32>
    %11 = arith.truncf %10 : vector<16x64xf32> to vector<16x64xbf16>
    %12 = vector.extract_strided_slice %7 {offsets = [0, 64], sizes = [16, 128], strides = [1, 1]} : vector<16x192xf32> to vector<16x128xf32>
    %13 = tpu.transpose %12, [1, 0] : vector<16x128xf32> -> vector<128x16xf32>
    %14 = vector.extract_strided_slice %13 {offsets = [0, 0], sizes = [64, 16], strides = [1, 1]} : vector<128x16xf32> to vector<64x16xf32>
    %15 = arith.truncf %14 : vector<64x16xf32> to vector<64x16xbf16>
    %16 = vector.extract_strided_slice %13 {offsets = [64, 0], sizes = [64, 16], strides = [1, 1]} : vector<128x16xf32> to vector<64x16xf32>
    %17 = arith.truncf %16 : vector<64x16xf32> to vector<64x16xbf16>
    %18 = tpu.iota {dimensions = array<i32: 0>} : vector<16x16xi32>
    %19 = tpu.iota {dimensions = array<i32: 1>} : vector<16x16xi32>
    %20 = arith.cmpi sle, %19, %18 : vector<16x16xi32>
    %21 = vector.extract_strided_slice %11 {offsets = [0, 0], sizes = [16, 8], strides = [1, 1]} : vector<16x64xbf16> to vector<16x8xbf16>
    %22 = vector.extract_strided_slice %15 {offsets = [0, 0], sizes = [8, 16], strides = [1, 1]} : vector<64x16xbf16> to vector<8x16xbf16>
    %23 = vector.extract_strided_slice %17 {offsets = [0, 0], sizes = [8, 16], strides = [1, 1]} : vector<64x16xbf16> to vector<8x16xbf16>
    %cst_7 = arith.constant dense<0.000000e+00> : vector<16x16xf32>
    %24 = tpu.matmul %21, %22, %cst_7 {dimension_numbers = #tpu.dot_dimension_numbers<[1], [0], [0], [1], [0, 0, 1, 1], [], []>} : vector<16x8xbf16>, vector<8x16xbf16>, vector<16x16xf32> -> vector<16x16xf32>
    %cst_8 = arith.constant -1.000000e+30 : f32
    %25 = vector.broadcast %cst_8 : f32 to vector<16x16xf32>
    %26 = arith.select %20, %24, %25 : vector<16x16xi1>, vector<16x16xf32>
    %cst_9 = arith.constant dense<0xFF800000> : vector<16xf32>
    %27 = vector.multi_reduction <maximumf>, %26, %cst_9 [1] : vector<16x16xf32> to vector<16xf32>
    %28 = vector.shape_cast %27 : vector<16xf32> to vector<16x1xf32>
    %29 = vector.broadcast %28 : vector<16x1xf32> to vector<16x16xf32>
    %30 = arith.subf %26, %29 : vector<16x16xf32>
    %31 = math.exp %30 : vector<16x16xf32>
    %cst_10 = arith.constant dense<0.000000e+00> : vector<16xf32>
    %32 = vector.multi_reduction <add>, %31, %cst_10 [1] : vector<16x16xf32> to vector<16xf32>
    %33 = vector.shape_cast %32 : vector<16xf32> to vector<16x1xf32>
    %34 = tpu.reciprocal %33 {approx = true} : vector<16x1xf32> -> vector<16x1xf32>
    %35 = vector.broadcast %34 : vector<16x1xf32> to vector<16x16xf32>
    %36 = arith.mulf %31, %35 : vector<16x16xf32>
    %37 = arith.truncf %36 : vector<16x16xf32> to vector<16x16xbf16>
    %cst_11 = arith.constant dense<0.000000e+00> : vector<8x16xf32>
    %38 = tpu.matmul %23, %37, %cst_11 {dimension_numbers = #tpu.dot_dimension_numbers<[1], [1], [0], [0], [0, 0, 1, 0], [], []>} : vector<8x16xbf16>, vector<16x16xbf16>, vector<8x16xf32> -> vector<8x16xf32>
    %39 = vector.extract_strided_slice %11 {offsets = [0, 8], sizes = [16, 8], strides = [1, 1]} : vector<16x64xbf16> to vector<16x8xbf16>
    %40 = vector.extract_strided_slice %15 {offsets = [8, 0], sizes = [8, 16], strides = [1, 1]} : vector<64x16xbf16> to vector<8x16xbf16>
    %41 = vector.extract_strided_slice %17 {offsets = [8, 0], sizes = [8, 16], strides = [1, 1]} : vector<64x16xbf16> to vector<8x16xbf16>
    %cst_12 = arith.constant dense<0.000000e+00> : vector<16x16xf32>
    %42 = tpu.matmul %39, %40, %cst_12 {dimension_numbers = #tpu.dot_dimension_numbers<[1], [0], [0], [1], [0, 0, 1, 1], [], []>} : vector<16x8xbf16>, vector<8x16xbf16>, vector<16x16xf32> -> vector<16x16xf32>
    %cst_13 = arith.constant -1.000000e+30 : f32
    %43 = vector.broadcast %cst_13 : f32 to vector<16x16xf32>
    %44 = arith.select %20, %42, %43 : vector<16x16xi1>, vector<16x16xf32>
    %cst_14 = arith.constant dense<0xFF800000> : vector<16xf32>
    %45 = vector.multi_reduction <maximumf>, %44, %cst_14 [1] : vector<16x16xf32> to vector<16xf32>
    %46 = vector.shape_cast %45 : vector<16xf32> to vector<16x1xf32>
    %47 = vector.broadcast %46 : vector<16x1xf32> to vector<16x16xf32>
    %48 = arith.subf %44, %47 : vector<16x16xf32>
    %49 = math.exp %48 : vector<16x16xf32>
    %cst_15 = arith.constant dense<0.000000e+00> : vector<16xf32>
    %50 = vector.multi_reduction <add>, %49, %cst_15 [1] : vector<16x16xf32> to vector<16xf32>
    %51 = vector.shape_cast %50 : vector<16xf32> to vector<16x1xf32>
    %52 = tpu.reciprocal %51 {approx = true} : vector<16x1xf32> -> vector<16x1xf32>
    %53 = vector.broadcast %52 : vector<16x1xf32> to vector<16x16xf32>
    %54 = arith.mulf %49, %53 : vector<16x16xf32>
    %55 = arith.truncf %54 : vector<16x16xf32> to vector<16x16xbf16>
    %cst_16 = arith.constant dense<0.000000e+00> : vector<8x16xf32>
    %56 = tpu.matmul %41, %55, %cst_16 {dimension_numbers = #tpu.dot_dimension_numbers<[1], [1], [0], [0], [0, 0, 1, 0], [], []>} : vector<8x16xbf16>, vector<16x16xbf16>, vector<8x16xf32> -> vector<8x16xf32>
    %57 = vector.extract_strided_slice %11 {offsets = [0, 16], sizes = [16, 8], strides = [1, 1]} : vector<16x64xbf16> to vector<16x8xbf16>
    %58 = vector.extract_strided_slice %15 {offsets = [16, 0], sizes = [8, 16], strides = [1, 1]} : vector<64x16xbf16> to vector<8x16xbf16>
    %59 = vector.extract_strided_slice %17 {offsets = [16, 0], sizes = [8, 16], strides = [1, 1]} : vector<64x16xbf16> to vector<8x16xbf16>
    %cst_17 = arith.constant dense<0.000000e+00> : vector<16x16xf32>
    %60 = tpu.matmul %57, %58, %cst_17 {dimension_numbers = #tpu.dot_dimension_numbers<[1], [0], [0], [1], [0, 0, 1, 1], [], []>} : vector<16x8xbf16>, vector<8x16xbf16>, vector<16x16xf32> -> vector<16x16xf32>
    %cst_18 = arith.constant -1.000000e+30 : f32
    %61 = vector.broadcast %cst_18 : f32 to vector<16x16xf32>
    %62 = arith.select %20, %60, %61 : vector<16x16xi1>, vector<16x16xf32>
    %cst_19 = arith.constant dense<0xFF800000> : vector<16xf32>
    %63 = vector.multi_reduction <maximumf>, %62, %cst_19 [1] : vector<16x16xf32> to vector<16xf32>
    %64 = vector.shape_cast %63 : vector<16xf32> to vector<16x1xf32>
    %65 = vector.broadcast %64 : vector<16x1xf32> to vector<16x16xf32>
    %66 = arith.subf %62, %65 : vector<16x16xf32>
    %67 = math.exp %66 : vector<16x16xf32>
    %cst_20 = arith.constant dense<0.000000e+00> : vector<16xf32>
    %68 = vector.multi_reduction <add>, %67, %cst_20 [1] : vector<16x16xf32> to vector<16xf32>
    %69 = vector.shape_cast %68 : vector<16xf32> to vector<16x1xf32>
    %70 = tpu.reciprocal %69 {approx = true} : vector<16x1xf32> -> vector<16x1xf32>
    %71 = vector.broadcast %70 : vector<16x1xf32> to vector<16x16xf32>
    %72 = arith.mulf %67, %71 : vector<16x16xf32>
    %73 = arith.truncf %72 : vector<16x16xf32> to vector<16x16xbf16>
    %cst_21 = arith.constant dense<0.000000e+00> : vector<8x16xf32>
    %74 = tpu.matmul %59, %73, %cst_21 {dimension_numbers = #tpu.dot_dimension_numbers<[1], [1], [0], [0], [0, 0, 1, 0], [], []>} : vector<8x16xbf16>, vector<16x16xbf16>, vector<8x16xf32> -> vector<8x16xf32>
    %75 = vector.extract_strided_slice %11 {offsets = [0, 24], sizes = [16, 8], strides = [1, 1]} : vector<16x64xbf16> to vector<16x8xbf16>
    %76 = vector.extract_strided_slice %15 {offsets = [24, 0], sizes = [8, 16], strides = [1, 1]} : vector<64x16xbf16> to vector<8x16xbf16>
    %77 = vector.extract_strided_slice %17 {offsets = [24, 0], sizes = [8, 16], strides = [1, 1]} : vector<64x16xbf16> to vector<8x16xbf16>
    %cst_22 = arith.constant dense<0.000000e+00> : vector<16x16xf32>
    %78 = tpu.matmul %75, %76, %cst_22 {dimension_numbers = #tpu.dot_dimension_numbers<[1], [0], [0], [1], [0, 0, 1, 1], [], []>} : vector<16x8xbf16>, vector<8x16xbf16>, vector<16x16xf32> -> vector<16x16xf32>
    %cst_23 = arith.constant -1.000000e+30 : f32
    %79 = vector.broadcast %cst_23 : f32 to vector<16x16xf32>
    %80 = arith.select %20, %78, %79 : vector<16x16xi1>, vector<16x16xf32>
    %cst_24 = arith.constant dense<0xFF800000> : vector<16xf32>
    %81 = vector.multi_reduction <maximumf>, %80, %cst_24 [1] : vector<16x16xf32> to vector<16xf32>
    %82 = vector.shape_cast %81 : vector<16xf32> to vector<16x1xf32>
    %83 = vector.broadcast %82 : vector<16x1xf32> to vector<16x16xf32>
    %84 = arith.subf %80, %83 : vector<16x16xf32>
    %85 = math.exp %84 : vector<16x16xf32>
    %cst_25 = arith.constant dense<0.000000e+00> : vector<16xf32>
    %86 = vector.multi_reduction <add>, %85, %cst_25 [1] : vector<16x16xf32> to vector<16xf32>
    %87 = vector.shape_cast %86 : vector<16xf32> to vector<16x1xf32>
    %88 = tpu.reciprocal %87 {approx = true} : vector<16x1xf32> -> vector<16x1xf32>
    %89 = vector.broadcast %88 : vector<16x1xf32> to vector<16x16xf32>
    %90 = arith.mulf %85, %89 : vector<16x16xf32>
    %91 = arith.truncf %90 : vector<16x16xf32> to vector<16x16xbf16>
    %cst_26 = arith.constant dense<0.000000e+00> : vector<8x16xf32>
    %92 = tpu.matmul %77, %91, %cst_26 {dimension_numbers = #tpu.dot_dimension_numbers<[1], [1], [0], [0], [0, 0, 1, 0], [], []>} : vector<8x16xbf16>, vector<16x16xbf16>, vector<8x16xf32> -> vector<8x16xf32>
    %93 = vector.extract_strided_slice %11 {offsets = [0, 32], sizes = [16, 8], strides = [1, 1]} : vector<16x64xbf16> to vector<16x8xbf16>
    %94 = vector.extract_strided_slice %15 {offsets = [32, 0], sizes = [8, 16], strides = [1, 1]} : vector<64x16xbf16> to vector<8x16xbf16>
    %95 = vector.extract_strided_slice %17 {offsets = [32, 0], sizes = [8, 16], strides = [1, 1]} : vector<64x16xbf16> to vector<8x16xbf16>
    %cst_27 = arith.constant dense<0.000000e+00> : vector<16x16xf32>
    %96 = tpu.matmul %93, %94, %cst_27 {dimension_numbers = #tpu.dot_dimension_numbers<[1], [0], [0], [1], [0, 0, 1, 1], [], []>} : vector<16x8xbf16>, vector<8x16xbf16>, vector<16x16xf32> -> vector<16x16xf32>
    %cst_28 = arith.constant -1.000000e+30 : f32
    %97 = vector.broadcast %cst_28 : f32 to vector<16x16xf32>
    %98 = arith.select %20, %96, %97 : vector<16x16xi1>, vector<16x16xf32>
    %cst_29 = arith.constant dense<0xFF800000> : vector<16xf32>
    %99 = vector.multi_reduction <maximumf>, %98, %cst_29 [1] : vector<16x16xf32> to vector<16xf32>
    %100 = vector.shape_cast %99 : vector<16xf32> to vector<16x1xf32>
    %101 = vector.broadcast %100 : vector<16x1xf32> to vector<16x16xf32>
    %102 = arith.subf %98, %101 : vector<16x16xf32>
    %103 = math.exp %102 : vector<16x16xf32>
    %cst_30 = arith.constant dense<0.000000e+00> : vector<16xf32>
    %104 = vector.multi_reduction <add>, %103, %cst_30 [1] : vector<16x16xf32> to vector<16xf32>
    %105 = vector.shape_cast %104 : vector<16xf32> to vector<16x1xf32>
    %106 = tpu.reciprocal %105 {approx = true} : vector<16x1xf32> -> vector<16x1xf32>
    %107 = vector.broadcast %106 : vector<16x1xf32> to vector<16x16xf32>
    %108 = arith.mulf %103, %107 : vector<16x16xf32>
    %109 = arith.truncf %108 : vector<16x16xf32> to vector<16x16xbf16>
    %cst_31 = arith.constant dense<0.000000e+00> : vector<8x16xf32>
    %110 = tpu.matmul %95, %109, %cst_31 {dimension_numbers = #tpu.dot_dimension_numbers<[1], [1], [0], [0], [0, 0, 1, 0], [], []>} : vector<8x16xbf16>, vector<16x16xbf16>, vector<8x16xf32> -> vector<8x16xf32>
    %111 = vector.extract_strided_slice %11 {offsets = [0, 40], sizes = [16, 8], strides = [1, 1]} : vector<16x64xbf16> to vector<16x8xbf16>
    %112 = vector.extract_strided_slice %15 {offsets = [40, 0], sizes = [8, 16], strides = [1, 1]} : vector<64x16xbf16> to vector<8x16xbf16>
    %113 = vector.extract_strided_slice %17 {offsets = [40, 0], sizes = [8, 16], strides = [1, 1]} : vector<64x16xbf16> to vector<8x16xbf16>
    %cst_32 = arith.constant dense<0.000000e+00> : vector<16x16xf32>
    %114 = tpu.matmul %111, %112, %cst_32 {dimension_numbers = #tpu.dot_dimension_numbers<[1], [0], [0], [1], [0, 0, 1, 1], [], []>} : vector<16x8xbf16>, vector<8x16xbf16>, vector<16x16xf32> -> vector<16x16xf32>
    %cst_33 = arith.constant -1.000000e+30 : f32
    %115 = vector.broadcast %cst_33 : f32 to vector<16x16xf32>
    %116 = arith.select %20, %114, %115 : vector<16x16xi1>, vector<16x16xf32>
    %cst_34 = arith.constant dense<0xFF800000> : vector<16xf32>
    %117 = vector.multi_reduction <maximumf>, %116, %cst_34 [1] : vector<16x16xf32> to vector<16xf32>
    %118 = vector.shape_cast %117 : vector<16xf32> to vector<16x1xf32>
    %119 = vector.broadcast %118 : vector<16x1xf32> to vector<16x16xf32>
    %120 = arith.subf %116, %119 : vector<16x16xf32>
    %121 = math.exp %120 : vector<16x16xf32>
    %cst_35 = arith.constant dense<0.000000e+00> : vector<16xf32>
    %122 = vector.multi_reduction <add>, %121, %cst_35 [1] : vector<16x16xf32> to vector<16xf32>
    %123 = vector.shape_cast %122 : vector<16xf32> to vector<16x1xf32>
    %124 = tpu.reciprocal %123 {approx = true} : vector<16x1xf32> -> vector<16x1xf32>
    %125 = vector.broadcast %124 : vector<16x1xf32> to vector<16x16xf32>
    %126 = arith.mulf %121, %125 : vector<16x16xf32>
    %127 = arith.truncf %126 : vector<16x16xf32> to vector<16x16xbf16>
    %cst_36 = arith.constant dense<0.000000e+00> : vector<8x16xf32>
    %128 = tpu.matmul %113, %127, %cst_36 {dimension_numbers = #tpu.dot_dimension_numbers<[1], [1], [0], [0], [0, 0, 1, 0], [], []>} : vector<8x16xbf16>, vector<16x16xbf16>, vector<8x16xf32> -> vector<8x16xf32>
    %129 = vector.extract_strided_slice %11 {offsets = [0, 48], sizes = [16, 8], strides = [1, 1]} : vector<16x64xbf16> to vector<16x8xbf16>
    %130 = vector.extract_strided_slice %15 {offsets = [48, 0], sizes = [8, 16], strides = [1, 1]} : vector<64x16xbf16> to vector<8x16xbf16>
    %131 = vector.extract_strided_slice %17 {offsets = [48, 0], sizes = [8, 16], strides = [1, 1]} : vector<64x16xbf16> to vector<8x16xbf16>
    %cst_37 = arith.constant dense<0.000000e+00> : vector<16x16xf32>
    %132 = tpu.matmul %129, %130, %cst_37 {dimension_numbers = #tpu.dot_dimension_numbers<[1], [0], [0], [1], [0, 0, 1, 1], [], []>} : vector<16x8xbf16>, vector<8x16xbf16>, vector<16x16xf32> -> vector<16x16xf32>
    %cst_38 = arith.constant -1.000000e+30 : f32
    %133 = vector.broadcast %cst_38 : f32 to vector<16x16xf32>
    %134 = arith.select %20, %132, %133 : vector<16x16xi1>, vector<16x16xf32>
    %cst_39 = arith.constant dense<0xFF800000> : vector<16xf32>
    %135 = vector.multi_reduction <maximumf>, %134, %cst_39 [1] : vector<16x16xf32> to vector<16xf32>
    %136 = vector.shape_cast %135 : vector<16xf32> to vector<16x1xf32>
    %137 = vector.broadcast %136 : vector<16x1xf32> to vector<16x16xf32>
    %138 = arith.subf %134, %137 : vector<16x16xf32>
    %139 = math.exp %138 : vector<16x16xf32>
    %cst_40 = arith.constant dense<0.000000e+00> : vector<16xf32>
    %140 = vector.multi_reduction <add>, %139, %cst_40 [1] : vector<16x16xf32> to vector<16xf32>
    %141 = vector.shape_cast %140 : vector<16xf32> to vector<16x1xf32>
    %142 = tpu.reciprocal %141 {approx = true} : vector<16x1xf32> -> vector<16x1xf32>
    %143 = vector.broadcast %142 : vector<16x1xf32> to vector<16x16xf32>
    %144 = arith.mulf %139, %143 : vector<16x16xf32>
    %145 = arith.truncf %144 : vector<16x16xf32> to vector<16x16xbf16>
    %cst_41 = arith.constant dense<0.000000e+00> : vector<8x16xf32>
    %146 = tpu.matmul %131, %145, %cst_41 {dimension_numbers = #tpu.dot_dimension_numbers<[1], [1], [0], [0], [0, 0, 1, 0], [], []>} : vector<8x16xbf16>, vector<16x16xbf16>, vector<8x16xf32> -> vector<8x16xf32>
    %147 = vector.extract_strided_slice %11 {offsets = [0, 56], sizes = [16, 8], strides = [1, 1]} : vector<16x64xbf16> to vector<16x8xbf16>
    %148 = vector.extract_strided_slice %15 {offsets = [56, 0], sizes = [8, 16], strides = [1, 1]} : vector<64x16xbf16> to vector<8x16xbf16>
    %149 = vector.extract_strided_slice %17 {offsets = [56, 0], sizes = [8, 16], strides = [1, 1]} : vector<64x16xbf16> to vector<8x16xbf16>
    %cst_42 = arith.constant dense<0.000000e+00> : vector<16x16xf32>
    %150 = tpu.matmul %147, %148, %cst_42 {dimension_numbers = #tpu.dot_dimension_numbers<[1], [0], [0], [1], [0, 0, 1, 1], [], []>} : vector<16x8xbf16>, vector<8x16xbf16>, vector<16x16xf32> -> vector<16x16xf32>
    %cst_43 = arith.constant -1.000000e+30 : f32
    %151 = vector.broadcast %cst_43 : f32 to vector<16x16xf32>
    %152 = arith.select %20, %150, %151 : vector<16x16xi1>, vector<16x16xf32>
    %cst_44 = arith.constant dense<0xFF800000> : vector<16xf32>
    %153 = vector.multi_reduction <maximumf>, %152, %cst_44 [1] : vector<16x16xf32> to vector<16xf32>
    %154 = vector.shape_cast %153 : vector<16xf32> to vector<16x1xf32>
    %155 = vector.broadcast %154 : vector<16x1xf32> to vector<16x16xf32>
    %156 = arith.subf %152, %155 : vector<16x16xf32>
    %157 = math.exp %156 : vector<16x16xf32>
    %cst_45 = arith.constant dense<0.000000e+00> : vector<16xf32>
    %158 = vector.multi_reduction <add>, %157, %cst_45 [1] : vector<16x16xf32> to vector<16xf32>
    %159 = vector.shape_cast %158 : vector<16xf32> to vector<16x1xf32>
    %160 = tpu.reciprocal %159 {approx = true} : vector<16x1xf32> -> vector<16x1xf32>
    %161 = vector.broadcast %160 : vector<16x1xf32> to vector<16x16xf32>
    %162 = arith.mulf %157, %161 : vector<16x16xf32>
    %163 = arith.truncf %162 : vector<16x16xf32> to vector<16x16xbf16>
    %cst_46 = arith.constant dense<0.000000e+00> : vector<8x16xf32>
    %164 = tpu.matmul %149, %163, %cst_46 {dimension_numbers = #tpu.dot_dimension_numbers<[1], [1], [0], [0], [0, 0, 1, 0], [], []>} : vector<8x16xbf16>, vector<16x16xbf16>, vector<8x16xf32> -> vector<8x16xf32>
    %165 = tpu.concatenate %38, %56, %74, %92, %110, %128, %146, %164 in 0 : vector<8x16xf32>, vector<8x16xf32>, vector<8x16xf32>, vector<8x16xf32>, vector<8x16xf32>, vector<8x16xf32>, vector<8x16xf32>, vector<8x16xf32> -> vector<64x16xf32>
    %166 = tpu.transpose %165, [1, 0] : vector<64x16xf32> -> vector<16x64xf32>
    %167 = arith.truncf %166 : vector<16x64xf32> to vector<16x64xbf16>
    %c0_47 = arith.constant 0 : index
    %c0_48 = arith.constant 0 : index
    %168 = vector.load %arg4[%c0_47, %c0_48] : memref<64x64xbf16, #tpu.memory_space<vmem>>, vector<64x64xbf16>
    %cst_49 = arith.constant dense<0.000000e+00> : vector<16x64xf32>
    %169 = tpu.matmul %167, %168, %cst_49 {dimension_numbers = #tpu.dot_dimension_numbers<[1], [0], [0], [1], [0, 0, 1, 1], [], []>} : vector<16x64xbf16>, vector<64x64xbf16>, vector<16x64xf32> -> vector<16x64xf32>
    %c0_50 = arith.constant 0 : index
    %c0_51 = arith.constant 0 : index
    %170 = vector.load %arg5[%c0_50, %c0_51] : memref<1x64xf32, #tpu.memory_space<vmem>>, vector<1x64xf32>
    %171 = vector.broadcast %170 : vector<1x64xf32> to vector<16x64xf32>
    %172 = arith.addf %169, %171 : vector<16x64xf32>
    %173 = arith.addf %172, %1 : vector<16x64xf32>
    %cst_52 = arith.constant dense<0.000000e+00> : vector<16xf32>
    %174 = vector.multi_reduction <add>, %173, %cst_52 [1] : vector<16x64xf32> to vector<16xf32>
    %175 = vector.shape_cast %174 : vector<16xf32> to vector<16x1xf32>
    %cst_53 = arith.constant 6.400000e+01 : f32
    %176 = vector.broadcast %cst_53 : f32 to vector<16x1xf32>
    %177 = arith.divf %175, %176 : vector<16x1xf32>
    %178 = vector.broadcast %177 : vector<16x1xf32> to vector<16x64xf32>
    %179 = arith.subf %173, %178 : vector<16x64xf32>
    %180 = arith.mulf %179, %179 : vector<16x64xf32>
    %cst_54 = arith.constant dense<0.000000e+00> : vector<16xf32>
    %181 = vector.multi_reduction <add>, %180, %cst_54 [1] : vector<16x64xf32> to vector<16xf32>
    %182 = vector.shape_cast %181 : vector<16xf32> to vector<16x1xf32>
    %cst_55 = arith.constant 6.400000e+01 : f32
    %183 = vector.broadcast %cst_55 : f32 to vector<16x1xf32>
    %184 = arith.divf %182, %183 : vector<16x1xf32>
    %cst_56 = arith.constant 9.99999974E-6 : f32
    %185 = vector.broadcast %cst_56 : f32 to vector<16x1xf32>
    %186 = arith.addf %184, %185 : vector<16x1xf32>
    %187 = math.rsqrt %186 : vector<16x1xf32>
    %188 = vector.broadcast %187 : vector<16x1xf32> to vector<16x64xf32>
    %189 = arith.mulf %179, %188 : vector<16x64xf32>
    %c0_57 = arith.constant 0 : index
    %c0_58 = arith.constant 0 : index
    %190 = vector.load %arg6[%c0_57, %c0_58] : memref<1x64xf32, #tpu.memory_space<vmem>>, vector<1x64xf32>
    %191 = vector.broadcast %190 : vector<1x64xf32> to vector<16x64xf32>
    %192 = arith.mulf %189, %191 : vector<16x64xf32>
    %c0_59 = arith.constant 0 : index
    %c0_60 = arith.constant 0 : index
    %193 = vector.load %arg7[%c0_59, %c0_60] : memref<1x64xf32, #tpu.memory_space<vmem>>, vector<1x64xf32>
    %194 = vector.broadcast %193 : vector<1x64xf32> to vector<16x64xf32>
    %195 = arith.addf %192, %194 : vector<16x64xf32>
    %196 = arith.truncf %195 : vector<16x64xf32> to vector<16x64xbf16>
    %c0_61 = arith.constant 0 : index
    %c0_62 = arith.constant 0 : index
    %197 = vector.load %arg8[%c0_61, %c0_62] : memref<64x256xbf16, #tpu.memory_space<vmem>>, vector<64x256xbf16>
    %cst_63 = arith.constant dense<0.000000e+00> : vector<16x256xf32>
    %198 = tpu.matmul %196, %197, %cst_63 {dimension_numbers = #tpu.dot_dimension_numbers<[1], [0], [0], [1], [0, 0, 1, 1], [], []>} : vector<16x64xbf16>, vector<64x256xbf16>, vector<16x256xf32> -> vector<16x256xf32>
    %c0_64 = arith.constant 0 : index
    %c0_65 = arith.constant 0 : index
    %199 = vector.load %arg9[%c0_64, %c0_65] : memref<1x256xf32, #tpu.memory_space<vmem>>, vector<1x256xf32>
    %200 = vector.broadcast %199 : vector<1x256xf32> to vector<16x256xf32>
    %201 = arith.addf %198, %200 : vector<16x256xf32>
    %cst_66 = arith.constant 0.000000e+00 : f32
    %202 = vector.broadcast %cst_66 : f32 to vector<16x256xf32>
    %203 = arith.cmpf ogt, %201, %202 : vector<16x256xf32>
    %cst_67 = arith.constant 0.00999999977 : f32
    %204 = vector.broadcast %cst_67 : f32 to vector<16x256xf32>
    %205 = arith.mulf %204, %201 : vector<16x256xf32>
    %206 = arith.select %203, %201, %205 : vector<16x256xi1>, vector<16x256xf32>
    %207 = arith.truncf %206 : vector<16x256xf32> to vector<16x256xbf16>
    %c0_68 = arith.constant 0 : index
    %c0_69 = arith.constant 0 : index
    %208 = vector.load %arg10[%c0_68, %c0_69] : memref<256x64xbf16, #tpu.memory_space<vmem>>, vector<256x64xbf16>
    %cst_70 = arith.constant dense<0.000000e+00> : vector<16x64xf32>
    %209 = tpu.matmul %207, %208, %cst_70 {dimension_numbers = #tpu.dot_dimension_numbers<[1], [0], [0], [1], [0, 0, 1, 1], [], []>} : vector<16x256xbf16>, vector<256x64xbf16>, vector<16x64xf32> -> vector<16x64xf32>
    %c0_71 = arith.constant 0 : index
    %c0_72 = arith.constant 0 : index
    %210 = vector.load %arg11[%c0_71, %c0_72] : memref<1x64xf32, #tpu.memory_space<vmem>>, vector<1x64xf32>
    %211 = vector.broadcast %210 : vector<1x64xf32> to vector<16x64xf32>
    %212 = arith.addf %209, %211 : vector<16x64xf32>
    %213 = arith.addf %212, %195 : vector<16x64xf32>
    %214 = vector.shape_cast %213 : vector<16x64xf32> to vector<1x16x64xf32>
    %c0_73 = arith.constant 0 : index
    %c0_74 = arith.constant 0 : index
    %c0_75 = arith.constant 0 : index
    %215 = vector.load %arg12[%c0_73, %c0_74, %c0_75] : memref<1x16x64xf32, #tpu.memory_space<vmem>>, vector<1x16x64xf32>
    tpu.vector_store %arg12[%c0_73, %c0_74, %c0_75], %214 {strides = array<i32>} : memref<1x16x64xf32, #tpu.memory_space<vmem>>, vector<1x16x64xf32>,
    return
  }
  func.func @transform_0(%arg0: i32) -> (i32, i32, i32) {
    %c0_i32 = arith.constant 0 : i32
    %c0_i32_0 = arith.constant 0 : i32
    %c0_i32_1 = arith.constant 0 : i32
    return %arg0, %c0_i32, %c0_i32_0 : i32, i32, i32
  }
  func.func @transform_1(%arg0: i32) -> (i32, i32) {
    %c0_i32 = arith.constant 0 : i32
    %c0_i32_0 = arith.constant 0 : i32
    %c0_i32_1 = arith.constant 0 : i32
    return %c0_i32, %c0_i32_0 : i32, i32
  }
  func.func @transform_2(%arg0: i32) -> (i32, i32) {
    %c0_i32 = arith.constant 0 : i32
    %c0_i32_0 = arith.constant 0 : i32
    %c0_i32_1 = arith.constant 0 : i32
    return %c0_i32, %c0_i32_0 : i32, i32
  }
  func.func @transform_3(%arg0: i32) -> (i32, i32) {
    %c0_i32 = arith.constant 0 : i32
    %c0_i32_0 = arith.constant 0 : i32
    %c0_i32_1 = arith.constant 0 : i32
    return %c0_i32, %c0_i32_0 : i32, i32
  }
  func.func @transform_4(%arg0: i32) -> (i32, i32) {
    %c0_i32 = arith.constant 0 : i32
    %c0_i32_0 = arith.constant 0 : i32
    %c0_i32_1 = arith.constant 0 : i32
    return %c0_i32, %c0_i32_0 : i32, i32
  }
  func.func @transform_5(%arg0: i32) -> (i32, i32) {
    %c0_i32 = arith.constant 0 : i32
    %c0_i32_0 = arith.constant 0 : i32
    %c0_i32_1 = arith.constant 0 : i32
    return %c0_i32, %c0_i32_0 : i32, i32
  }
  func.func @transform_6(%arg0: i32) -> (i32, i32) {
    %c0_i32 = arith.constant 0 : i32
    %c0_i32_0 = arith.constant 0 : i32
    %c0_i32_1 = arith.constant 0 : i32
    return %c0_i32, %c0_i32_0 : i32, i32
  }
  func.func @transform_7(%arg0: i32) -> (i32, i32) {
    %c0_i32 = arith.constant 0 : i32
    %c0_i32_0 = arith.constant 0 : i32
    %c0_i32_1 = arith.constant 0 : i32
    return %c0_i32, %c0_i32_0 : i32, i32
  }
  func.func @transform_8(%arg0: i32) -> (i32, i32) {
    %c0_i32 = arith.constant 0 : i32
    %c0_i32_0 = arith.constant 0 : i32
    %c0_i32_1 = arith.constant 0 : i32
    return %c0_i32, %c0_i32_0 : i32, i32
  }
  func.func @transform_9(%arg0: i32) -> (i32, i32) {
    %c0_i32 = arith.constant 0 : i32
    %c0_i32_0 = arith.constant 0 : i32
    %c0_i32_1 = arith.constant 0 : i32
    return %c0_i32, %c0_i32_0 : i32, i32
  }
  func.func @transform_10(%arg0: i32) -> (i32, i32) {
    %c0_i32 = arith.constant 0 : i32
    %c0_i32_0 = arith.constant 0 : i32
    %c0_i32_1 = arith.constant 0 : i32
    return %c0_i32, %c0_i32_0 : i32, i32
  }
  func.func @transform_11(%arg0: i32) -> (i32, i32, i32) {
    %c0_i32 = arith.constant 0 : i32
    %c0_i32_0 = arith.constant 0 : i32
    %c0_i32_1 = arith.constant 0 : i32
    return %arg0, %c0_i32, %c0_i32_0 : i32, i32, i32
  }
}

</mosaic_0001>

<llo_original>
// kernel: tpu_custom_call.1
$region0: #{tpu_custom_call.1}
  #allocation0 [shape = 'u32[]', space=smem, size = 0x4, offset = 0x4, fixed_abs, tag = 'smem constant byte address 0x4 - core index']
  #allocation1 [shape = 'u32[72,128]{1,0:T(1,128)}', space=vmem, size = 0x9000, scoped, tag = 'internal scratch']
  %s0 = inlined_call_operand.vmem [shape: f32[2,16,64], index: 0, kind: input, shape index: {}]
  %s1 = inlined_call_operand.vmem [shape: bf16[64,192], index: 1, kind: input, shape index: {}]
  %s2 = inlined_call_operand.hbm [shape: f32[1,192], index: 2, kind: input, shape index: {}]
  %s3 = inlined_call_operand.vmem [shape: bf16[64,64], index: 3, kind: input, shape index: {}]
  %s4 = inlined_call_operand.hbm [shape: f32[1,64], index: 4, kind: input, shape index: {}]
  %s5 = inlined_call_operand.hbm [shape: f32[1,64], index: 5, kind: input, shape index: {}]
  %s6 = inlined_call_operand.vmem [shape: f32[1,64], index: 6, kind: input, shape index: {}]
  %s7 = inlined_call_operand.vmem [shape: bf16[64,256], index: 7, kind: input, shape index: {}]
  %s8 = inlined_call_operand.vmem [shape: f32[1,256], index: 8, kind: input, shape index: {}]
  %s9 = inlined_call_operand.vmem [shape: bf16[256,64], index: 9, kind: input, shape index: {}]
  %s10 = inlined_call_operand.vmem [shape: f32[1,64], index: 10, kind: input, shape index: {}]
  %s11 = inlined_call_operand.hbm [shape: f32[2,16,64], index: 11, kind: output, shape index: {}]
  %s12 = sld [smem:[#allocation0]]
  $region89: #{tpu_custom_call.1} parent=0
    _
  %s14 = ssub.s32 1, %s12
  %s15 = scalar_select 0, %s14, %s12
  $region1: #{tpu_custom_call.1} parent=0
    #allocation2 [shape = 'u8[1024]{0}', space=vmem, size = 0x400, scoped, tag = 'input window, operand 2, single buffered']
    #allocation3 [shape = 's32[2]{0}', space=sflag, size = 0x8, scoped, tag = 'scoped memory for tpu_custom_call.1']
    #allocation4 [shape = 's32[2]{0}', space=sflag, size = 0x8, scoped, tag = 'scoped memory for tpu_custom_call.1']
    #allocation5 [shape = 'u8[512]{0}', space=vmem, size = 0x400, scoped, tag = 'input window, operand 4, single buffered']
    #allocation6 [shape = 's32[1]{0}', space=sflag, size = 0x4, scoped, tag = 'scoped memory for tpu_custom_call.1']
    #allocation7 [shape = 'u8[512]{0}', space=vmem, size = 0x400, scoped, tag = 'input window, operand 5, single buffered']
    #allocation8 [shape = 'u8[16384]{0}', space=vmem, size = 0x4000, scoped, tag = 'output window, operand 0']
    %16 = vsyncpa [#allocation3], 0
    %17 = vsyncpa [#allocation6], 0
    %18 = vsyncpa [#allocation4], 0
    %s19 = scalar_lea.sflag [#allocation4], 1
    %20 = vsyncpa %s19, 0
    loop: start=0, step=1, limit=4
    $region2: #{tpu_custom_call.1} parent=1 // loop_pre_header
      _
    $region3: #{tpu_custom_call.1} parent=1 // loop_header
      %s22 = sphi 0, %s26
      %p23 = scmp.ge.s32.totalorder %s22, 4
      %s32 = sphi 0, %s34
      %s35 = sphi 0, %s32
      %s36 = sphi 0, %s35
      %s52 = sphi 0, %s36
      %s56 = sphi 0, %s56
      %s58 = sphi 0, %s56
      %s59 = sphi 0, %s58
      %s73 = sphi 0, %s59
      %s77 = sphi 0, %s77
      %s79 = sphi 0, %s77
      %s80 = sphi 0, %s79
      %s94 = sphi 0, %s80
      %s98 = sphi 0, %s98
      %s100 = sphi 0, %s98
      %s101 = sphi 0, %s100
      %s115 = sphi 0, %s101
      %s119 = sphi 0, %s119
      %s121 = sphi 0, %s119
      %s122 = sphi 0, %s121
      %s136 = sphi 0, %s122
      %s140 = sphi 0, %s140
      %s142 = sphi 0, %s140
      %s143 = sphi 0, %s142
      %s157 = sphi 0, %s143
      %s161 = sphi 0, %s161
      %s163 = sphi 0, %s161
      %s164 = sphi 0, %s163
      %s178 = sphi 0, %s164
      %s182 = sphi 0, %s182
      %s184 = sphi 0, %s182
      %s185 = sphi 0, %s184
      %s199 = sphi 0, %s185
      %s203 = sphi 0, %s203
      %s205 = sphi 0, %s203
      %s206 = sphi 0, %s205
      %s220 = sphi 0, %s206
      %s224 = sphi 0, %s224
      %s226 = sphi 0, %s224
      %s227 = sphi 0, %s226
      %s241 = sphi 0, %s227
      %s245 = sphi 0, %s245
      %s247 = sphi 0, %s245
      %s248 = sphi 0, %s247
      %s262 = sphi 0, %s248
      %s268 = sphi 0, %s270
      %s271 = sphi 0, %s268
      %s272 = sphi 0, %s271
      %s288 = sphi 0, %s272
    $region4: #{tpu_custom_call.1} parent=1 // loop_header_branch
      %25 = sbr.rel (%p23) target = $region8
    $region5: #{tpu_custom_call.1} parent=1 // loop_body
      %s27 = ssub.s32 %s22, 1
      %s28 = ssub.s32 %s22, 2
      %s29 = sadd.s32 %s22, 1
      %s30 = ssub.s32 %s22, %s29
      %p31 = scmp.eq.s32.totalorder %s30, 0
      %s33 = sadd.s32 %s32, 1
      %s34 = scalar_select %p31, %s32, %s33
      %p37 = pneg %p31
      %p38 = scmp.eq.s32.totalorder %s22, 1
      %p39 = por %p37, %p38
      %p40 = scmp.ne.s32.totalorder %s32, %s35
      %p41 = scmp.eq.s32.totalorder %s22, 0
      %p42 = por %p40, %p41
      %p43 = scmp.ne.s32.totalorder %s32, %s35
      %p44 = scmp.eq.s32.totalorder %s27, 1
      %p45 = por %p43, %p44
      %p46 = scmp.ne.s32.totalorder %s35, %s36
      %p47 = scmp.eq.s32.totalorder %s27, 0
      %p48 = por %p46, %p47
      %p49 = scmp.ne.s32.totalorder %s35, %s36
      %p50 = scmp.eq.s32.totalorder %s28, 1
      %p51 = por %p49, %p50
      %p53 = scmp.ne.s32.totalorder %s36, %s52
      %p54 = scmp.eq.s32.totalorder %s28, 0
      %p55 = por %p53, %p54
      %s57 = sadd.s32 %s56, 1
      %p60 = scmp.eq.s32.totalorder %s22, 1
      %p61 = scmp.ne.s32.totalorder %s56, %s58
      %p62 = scmp.eq.s32.totalorder %s22, 0
      %p63 = por %p61, %p62
      %p64 = scmp.ne.s32.totalorder %s56, %s58
      %p65 = scmp.eq.s32.totalorder %s27, 1
      %p66 = por %p64, %p65
      %p67 = scmp.ne.s32.totalorder %s58, %s59
      %p68 = scmp.eq.s32.totalorder %s27, 0
      %p69 = por %p67, %p68
      %p70 = scmp.ne.s32.totalorder %s58, %s59
      %p71 = scmp.eq.s32.totalorder %s28, 1
      %p72 = por %p70, %p71
      %p74 = scmp.ne.s32.totalorder %s59, %s73
      %p75 = scmp.eq.s32.totalorder %s28, 0
      %p76 = por %p74, %p75
      %s78 = sadd.s32 %s77, 1
      %p81 = scmp.eq.s32.totalorder %s22, 1
      %p82 = scmp.ne.s32.totalorder %s77, %s79
      %p83 = scmp.eq.s32.totalorder %s22, 0
      %p84 = por %p82, %p83
      %p85 = scmp.ne.s32.totalorder %s77, %s79
      %p86 = scmp.eq.s32.totalorder %s27, 1
      %p87 = por %p85, %p86
      %p88 = scmp.ne.s32.totalorder %s79, %s80
      %p89 = scmp.eq.s32.totalorder %s27, 0
      %p90 = por %p88, %p89
      %p91 = scmp.ne.s32.totalorder %s79, %s80
      %p92 = scmp.eq.s32.totalorder %s28, 1
      %p93 = por %p91, %p92
      %p95 = scmp.ne.s32.totalorder %s80, %s94
      %p96 = scmp.eq.s32.totalorder %s28, 0
      %p97 = por %p95, %p96
      %s99 = sadd.s32 %s98, 1
      %p102 = scmp.eq.s32.totalorder %s22, 1
      %p103 = scmp.ne.s32.totalorder %s98, %s100
      %p104 = scmp.eq.s32.totalorder %s22, 0
      %p105 = por %p103, %p104
      %p106 = scmp.ne.s32.totalorder %s98, %s100
      %p107 = scmp.eq.s32.totalorder %s27, 1
      %p108 = por %p106, %p107
      %p109 = scmp.ne.s32.totalorder %s100, %s101
      %p110 = scmp.eq.s32.totalorder %s27, 0
      %p111 = por %p109, %p110
      %p112 = scmp.ne.s32.totalorder %s100, %s101
      %p113 = scmp.eq.s32.totalorder %s28, 1
      %p114 = por %p112, %p113
      %p116 = scmp.ne.s32.totalorder %s101, %s115
      %p117 = scmp.eq.s32.totalorder %s28, 0
      %p118 = por %p116, %p117
      %s120 = sadd.s32 %s119, 1
      %p123 = scmp.eq.s32.totalorder %s22, 1
      %p124 = scmp.ne.s32.totalorder %s119, %s121
      %p125 = scmp.eq.s32.totalorder %s22, 0
      %p126 = por %p124, %p125
      %p127 = scmp.ne.s32.totalorder %s119, %s121
      %p128 = scmp.eq.s32.totalorder %s27, 1
      %p129 = por %p127, %p128
      %p130 = scmp.ne.s32.totalorder %s121, %s122
      %p131 = scmp.eq.s32.totalorder %s27, 0
      %p132 = por %p130, %p131
      %p133 = scmp.ne.s32.totalorder %s121, %s122
      %p134 = scmp.eq.s32.totalorder %s28, 1
      %p135 = por %p133, %p134
      %p137 = scmp.ne.s32.totalorder %s122, %s136
      %p138 = scmp.eq.s32.totalorder %s28, 0
      %p139 = por %p137, %p138
      %s141 = sadd.s32 %s140, 1
      %p144 = scmp.eq.s32.totalorder %s22, 1
      %p145 = scmp.ne.s32.totalorder %s140, %s142
      %p146 = scmp.eq.s32.totalorder %s22, 0
      %p147 = por %p145, %p146
      %p148 = scmp.ne.s32.totalorder %s140, %s142
      %p149 = scmp.eq.s32.totalorder %s27, 1
      %p150 = por %p148, %p149
      %p151 = scmp.ne.s32.totalorder %s142, %s143
      %p152 = scmp.eq.s32.totalorder %s27, 0
      %p153 = por %p151, %p152
      %p154 = scmp.ne.s32.totalorder %s142, %s143
      %p155 = scmp.eq.s32.totalorder %s28, 1
      %p156 = por %p154, %p155
      %p158 = scmp.ne.s32.totalorder %s143, %s157
      %p159 = scmp.eq.s32.totalorder %s28, 0
      %p160 = por %p158, %p159
      %s162 = sadd.s32 %s161, 1
      %p165 = scmp.eq.s32.totalorder %s22, 1
      %p166 = scmp.ne.s32.totalorder %s161, %s163
      %p167 = scmp.eq.s32.totalorder %s22, 0
      %p168 = por %p166, %p167
      %p169 = scmp.ne.s32.totalorder %s161, %s163
      %p170 = scmp.eq.s32.totalorder %s27, 1
      %p171 = por %p169, %p170
      %p172 = scmp.ne.s32.totalorder %s163, %s164
      %p173 = scmp.eq.s32.totalorder %s27, 0
      %p174 = por %p172, %p173
      %p175 = scmp.ne.s32.totalorder %s163, %s164
      %p176 = scmp.eq.s32.totalorder %s28, 1
      %p177 = por %p175, %p176
      %p179 = scmp.ne.s32.totalorder %s164, %s178
      %p180 = scmp.eq.s32.totalorder %s28, 0
      %p181 = por %p179, %p180
      %s183 = sadd.s32 %s182, 1
      %p186 = scmp.eq.s32.totalorder %s22, 1
      %p187 = scmp.ne.s32.totalorder %s182, %s184
      %p188 = scmp.eq.s32.totalorder %s22, 0
      %p189 = por %p187, %p188
      %p190 = scmp.ne.s32.totalorder %s182, %s184
      %p191 = scmp.eq.s32.totalorder %s27, 1
      %p192 = por %p190, %p191
      %p193 = scmp.ne.s32.totalorder %s184, %s185
      %p194 = scmp.eq.s32.totalorder %s27, 0
      %p195 = por %p193, %p194
      %p196 = scmp.ne.s32.totalorder %s184, %s185
      %p197 = scmp.eq.s32.totalorder %s28, 1
      %p198 = por %p196, %p197
      %p200 = scmp.ne.s32.totalorder %s185, %s199
      %p201 = scmp.eq.s32.totalorder %s28, 0
      %p202 = por %p200, %p201
      %s204 = sadd.s32 %s203, 1
      %p207 = scmp.eq.s32.totalorder %s22, 1
      %p208 = scmp.ne.s32.totalorder %s203, %s205
      %p209 = scmp.eq.s32.totalorder %s22, 0
      %p210 = por %p208, %p209
      %p211 = scmp.ne.s32.totalorder %s203, %s205
      %p212 = scmp.eq.s32.totalorder %s27, 1
      %p213 = por %p211, %p212
      %p214 = scmp.ne.s32.totalorder %s205, %s206
      %p215 = scmp.eq.s32.totalorder %s27, 0
      %p216 = por %p214, %p215
      %p217 = scmp.ne.s32.totalorder %s205, %s206
      %p218 = scmp.eq.s32.totalorder %s28, 1
      %p219 = por %p217, %p218
      %p221 = scmp.ne.s32.totalorder %s206, %s220
      %p222 = scmp.eq.s32.totalorder %s28, 0
      %p223 = por %p221, %p222
      %s225 = sadd.s32 %s224, 1
      %p228 = scmp.eq.s32.totalorder %s22, 1
      %p229 = scmp.ne.s32.totalorder %s224, %s226
      %p230 = scmp.eq.s32.totalorder %s22, 0
      %p231 = por %p229, %p230
      %p232 = scmp.ne.s32.totalorder %s224, %s226
      %p233 = scmp.eq.s32.totalorder %s27, 1
      %p234 = por %p232, %p233
      %p235 = scmp.ne.s32.totalorder %s226, %s227
      %p236 = scmp.eq.s32.totalorder %s27, 0
      %p237 = por %p235, %p236
      %p238 = scmp.ne.s32.totalorder %s226, %s227
      %p239 = scmp.eq.s32.totalorder %s28, 1
      %p240 = por %p238, %p239
      %p242 = scmp.ne.s32.totalorder %s227, %s241
      %p243 = scmp.eq.s32.totalorder %s28, 0
      %p244 = por %p242, %p243
      %s246 = sadd.s32 %s245, 1
      %p249 = scmp.eq.s32.totalorder %s22, 1
      %p250 = scmp.ne.s32.totalorder %s245, %s247
      %p251 = scmp.eq.s32.totalorder %s22, 0
      %p252 = por %p250, %p251
      %p253 = scmp.ne.s32.totalorder %s245, %s247
      %p254 = scmp.eq.s32.totalorder %s27, 1
      %p255 = por %p253, %p254
      %p256 = scmp.ne.s32.totalorder %s247, %s248
      %p257 = scmp.eq.s32.totalorder %s27, 0
      %p258 = por %p256, %p257
      %p259 = scmp.ne.s32.totalorder %s247, %s248
      %p260 = scmp.eq.s32.totalorder %s28, 1
      %p261 = por %p259, %p260
      %p263 = scmp.ne.s32.totalorder %s248, %s262
      %p264 = scmp.eq.s32.totalorder %s28, 0
      %p265 = por %p263, %p264
      %s266 = ssub.s32 %s22, %s29
      %p267 = scmp.eq.s32.totalorder %s266, 0
      %s269 = sadd.s32 %s268, 1
      %s270 = scalar_select %p267, %s268, %s269
      %p273 = pneg %p267
      %p274 = scmp.eq.s32.totalorder %s22, 1
      %p275 = por %p273, %p274
      %p276 = scmp.ne.s32.totalorder %s268, %s271
      %p277 = scmp.eq.s32.totalorder %s22, 0
      %p278 = por %p276, %p277
      %p279 = scmp.ne.s32.totalorder %s268, %s271
      %p280 = scmp.eq.s32.totalorder %s27, 1
      %p281 = por %p279, %p280
      %p282 = scmp.ne.s32.totalorder %s271, %s272
      %p283 = scmp.eq.s32.totalorder %s27, 0
      %p284 = por %p282, %p283
      %p285 = scmp.ne.s32.totalorder %s271, %s272
      %p286 = scmp.eq.s32.totalorder %s28, 1
      %p287 = por %p285, %p286
      %p289 = scmp.ne.s32.totalorder %s272, %s288
      %p290 = scmp.eq.s32.totalorder %s28, 0
      %p291 = por %p289, %p290
      %p292 = scmp.le.s32.totalorder 1, %s22
      %p293 = scmp.lt.s32.totalorder %s22, 3
      %p294 = pnand %p292, %p293
      %p295 = pneg %p294
      // Predicated region
      $region9: #{tpu_custom_call.1} parent=5 // pred_check
        _
      $region10: #{tpu_custom_call.1} parent=5 // pred_check_branch
        %297 = sbr.rel (%p294) target = $region12
      $region11: #{tpu_custom_call.1} parent=5 // pred_region
        %s298 = ssub.s32 %s22, 1
        // Predicated region
        $region13: #{tpu_custom_call.1} parent=11 // pred_check
          %p299 = pneg %p69
        $region14: #{tpu_custom_call.1} parent=11 // pred_check_branch
          %301 = sbr.rel (%p299) target = $region16
        $region15: #{tpu_custom_call.1} parent=11 // pred_region
          _
        $region16: #{tpu_custom_call.1} parent=11 // pred_fallthru
          _
        // Predicated region
        $region17: #{tpu_custom_call.1} parent=11 // pred_check
          %p302 = pneg %p90
        $region18: #{tpu_custom_call.1} parent=11 // pred_check_branch
          %304 = sbr.rel (%p302) target = $region20
        $region19: #{tpu_custom_call.1} parent=11 // pred_region
          %306 = vsyncadd [#allocation3], 0
          %s308 = sshll.u32 %s2, 4
          %s309 = int_to_ptr.hbm [resolvable:$true] %s308
          %s310 = sshll.u32 [#allocation2], 4
          %s311 = int_to_ptr.vmem [resolvable:$true] %s310
          %313 = dma.hbm_to_vmem [thread:$0]  %s309, 32, %s311, [#allocation3]
        $region20: #{tpu_custom_call.1} parent=11 // pred_fallthru
          _
        // Predicated region
        $region21: #{tpu_custom_call.1} parent=11 // pred_check
          %p314 = pneg %p111
        $region22: #{tpu_custom_call.1} parent=11 // pred_check_branch
          %316 = sbr.rel (%p314) target = $region24
        $region23: #{tpu_custom_call.1} parent=11 // pred_region
          _
        $region24: #{tpu_custom_call.1} parent=11 // pred_fallthru
          _
        // Predicated region
        $region25: #{tpu_custom_call.1} parent=11 // pred_check
          %p317 = pneg %p132
        $region26: #{tpu_custom_call.1} parent=11 // pred_check_branch
          %319 = sbr.rel (%p317) target = $region28
        $region27: #{tpu_custom_call.1} parent=11 // pred_region
          %321 = vsyncadd [#allocation6], 0
          %s323 = sshll.u32 %s4, 4
          %s324 = int_to_ptr.hbm [resolvable:$true] %s323
          %s325 = sshll.u32 [#allocation5], 4
          %s326 = int_to_ptr.vmem [resolvable:$true] %s325
          %328 = dma.hbm_to_vmem [thread:$0]  %s324, 16, %s326, [#allocation6]
        $region28: #{tpu_custom_call.1} parent=11 // pred_fallthru
          _
        // Predicated region
        $region29: #{tpu_custom_call.1} parent=11 // pred_check
          %p329 = pneg %p153
        $region30: #{tpu_custom_call.1} parent=11 // pred_check_branch
          %331 = sbr.rel (%p329) target = $region32
        $region31: #{tpu_custom_call.1} parent=11 // pred_region
          %333 = vsyncadd [#allocation6], 0
          %s335 = sshll.u32 %s5, 4
          %s336 = int_to_ptr.hbm [resolvable:$true] %s335
          %s337 = sshll.u32 [#allocation7], 4
          %s338 = int_to_ptr.vmem [resolvable:$true] %s337
          %340 = dma.hbm_to_vmem [thread:$0]  %s336, 16, %s338, [#allocation6]
        $region32: #{tpu_custom_call.1} parent=11 // pred_fallthru
          _
        // Predicated region
        $region33: #{tpu_custom_call.1} parent=11 // pred_check
          %p341 = pneg %p174
        $region34: #{tpu_custom_call.1} parent=11 // pred_check_branch
          %343 = sbr.rel (%p341) target = $region36
        $region35: #{tpu_custom_call.1} parent=11 // pred_region
          _
        $region36: #{tpu_custom_call.1} parent=11 // pred_fallthru
          _
        // Predicated region
        $region37: #{tpu_custom_call.1} parent=11 // pred_check
          %p344 = pneg %p195
        $region38: #{tpu_custom_call.1} parent=11 // pred_check_branch
          %346 = sbr.rel (%p344) target = $region40
        $region39: #{tpu_custom_call.1} parent=11 // pred_region
          _
        $region40: #{tpu_custom_call.1} parent=11 // pred_fallthru
          _
        // Predicated region
        $region41: #{tpu_custom_call.1} parent=11 // pred_check
          %p347 = pneg %p216
        $region42: #{tpu_custom_call.1} parent=11 // pred_check_branch
          %349 = sbr.rel (%p347) target = $region44
        $region43: #{tpu_custom_call.1} parent=11 // pred_region
          _
        $region44: #{tpu_custom_call.1} parent=11 // pred_fallthru
          _
        // Predicated region
        $region45: #{tpu_custom_call.1} parent=11 // pred_check
          %p350 = pneg %p237
        $region46: #{tpu_custom_call.1} parent=11 // pred_check_branch
          %352 = sbr.rel (%p350) target = $region48
        $region47: #{tpu_custom_call.1} parent=11 // pred_region
          _
        $region48: #{tpu_custom_call.1} parent=11 // pred_fallthru
          _
        // Predicated region
        $region49: #{tpu_custom_call.1} parent=11 // pred_check
          %p353 = pneg %p258
        $region50: #{tpu_custom_call.1} parent=11 // pred_check_branch
          %355 = sbr.rel (%p353) target = $region52
        $region51: #{tpu_custom_call.1} parent=11 // pred_region
          _
        $region52: #{tpu_custom_call.1} parent=11 // pred_fallthru
          _
      $region12: #{tpu_custom_call.1} parent=5 // pred_fallthru
        _
      %p356 = scmp.lt.s32.totalorder %s22, 2
      // Predicated region
      $region53: #{tpu_custom_call.1} parent=5 // pred_check
        %p357 = pneg %p356
      $region54: #{tpu_custom_call.1} parent=5 // pred_check_branch
        %359 = sbr.rel (%p357) target = $region56
      $region55: #{tpu_custom_call.1} parent=5 // pred_region
        // Predicated region
        $region57: #{tpu_custom_call.1} parent=55 // pred_check
          %p360 = pneg %p42
        $region58: #{tpu_custom_call.1} parent=55 // pred_check_branch
          %362 = sbr.rel (%p360) target = $region60
        $region59: #{tpu_custom_call.1} parent=55 // pred_region
          %p363 = scmp.lt.s32.totalorder %s22, 1
          %s364 = scalar_select %p363, %s22, 1
          %s365 = smul.addr %s364, 2
          %s366 = smul.addr %s365, 8
          %s367 = scalar_lea.vmem %s0, %s366
        $region60: #{tpu_custom_call.1} parent=55 // pred_fallthru
          _
      $region56: #{tpu_custom_call.1} parent=5 // pred_fallthru
        _
      %p368 = scmp.le.s32.totalorder 1, %s22
      %p369 = scmp.lt.s32.totalorder %s22, 3
      %p370 = pnand %p368, %p369
      %p371 = pneg %p370
      // Predicated region
      $region61: #{tpu_custom_call.1} parent=5 // pred_check
        _
      $region62: #{tpu_custom_call.1} parent=5 // pred_check_branch
        %373 = sbr.rel (%p370) target = $region64
      $region63: #{tpu_custom_call.1} parent=5 // pred_region
        %s374 = ssub.s32 %s22, 1
        // Predicated region
        $region65: #{tpu_custom_call.1} parent=63 // pred_check
          %p375 = pneg %p90
        $region66: #{tpu_custom_call.1} parent=63 // pred_check_branch
          %377 = sbr.rel (%p375) target = $region68
        $region67: #{tpu_custom_call.1} parent=63 // pred_region
          %379 = dma.done [#allocation3], 32
        $region68: #{tpu_custom_call.1} parent=63 // pred_fallthru
          _
        // Predicated region
        $region69: #{tpu_custom_call.1} parent=63 // pred_check
          %p380 = pneg %p132
        $region70: #{tpu_custom_call.1} parent=63 // pred_check_branch
          %382 = sbr.rel (%p380) target = $region72
        $region71: #{tpu_custom_call.1} parent=63 // pred_region
          %384 = dma.done [#allocation6], 16
        $region72: #{tpu_custom_call.1} parent=63 // pred_fallthru
          _
        // Predicated region
        $region73: #{tpu_custom_call.1} parent=63 // pred_check
          %p385 = pneg %p153
        $region74: #{tpu_custom_call.1} parent=63 // pred_check_branch
          %387 = sbr.rel (%p385) target = $region76
        $region75: #{tpu_custom_call.1} parent=63 // pred_region
          %389 = dma.done [#allocation6], 16
        $region76: #{tpu_custom_call.1} parent=63 // pred_fallthru
          _
        %p390 = scmp.lt.s32.totalorder %s27, 1
        %s391 = scalar_select %p390, %s27, 1
        %s392 = smul.addr %s391, 2
        %s393 = smul.addr %s392, 8
        %s394 = scalar_lea.vmem %s0, %s393
        %p395 = pneg %p48
        %p396 = pneg %p45
        %p397 = pneg %p69
        %p398 = pneg %p66
        %p399 = pneg %p90
        %p400 = pneg %p87
        %p401 = pneg %p111
        %p402 = pneg %p108
        %p403 = pneg %p132
        %p404 = pneg %p129
        %p405 = pneg %p153
        %p406 = pneg %p150
        %p407 = pneg %p174
        %p408 = pneg %p171
        %p409 = pneg %p195
        %p410 = pneg %p192
        %p411 = pneg %p216
        %p412 = pneg %p213
        %p413 = pneg %p237
        %p414 = pneg %p234
        %p415 = pneg %p258
        %p416 = pneg %p255
        %p417 = pneg %p284
        %p418 = pneg %p281
        %s419 = sand.u32 %s271, 1
        %s420 = scalar_lea.sflag [#allocation4], %s419
        %s421 = sand.u32 %s271, 1
        %s422 = smul.addr %s421, 16
        %s423 = scalar_lea.vmem [#allocation8], %s422
        %p424 = scmp.lt.s32.totalorder %s27, 1
        %s425 = scalar_select %p424, %s27, 1
        %s426 = smul.addr %s425, 2
        %s427 = smul.addr %s426, 8
        %s428 = scalar_lea.vmem %s0, %s427
        %v430 = vld [vmem:[%s428] sm:$0xff]
        %v431 = vld [vmem:[%s428 + $0x8] sm:$0xff]
        %v432 = vpack.c.bf16 %v431, %v430
        %v433 = vld [vmem:[%s1] sm:$0xff]
        %v434 = vld [vmem:[%s1 + $0x8] sm:$0xff]
        %v435 = vld [vmem:[%s1 + $0x10] sm:$0xff]
        %v436 = vld [vmem:[%s1 + $0x18] sm:$0xff]
        %v437 = vld [vmem:[%s1 + $0x20] sm:$0xff]
        %v438 = vld [vmem:[%s1 + $0x28] sm:$0xff]
        %v439 = vld [vmem:[%s1 + $0x30] sm:$0xff]
        %v440 = vld [vmem:[%s1 + $0x38] sm:$0xff]
        %v441 = vld [vmem:[#allocation2] sm:$0x3]
        %v443 = vperm.slane %v441, 0
        %v444 = vperm.slane %v441, 1
        %v455 = vunpack.c.l.b16 %v433
        %v456 = vunpack.c.h.b16 %v433
        %v457 = vunpack.c.l.b16 %v434
        %v458 = vunpack.c.h.b16 %v434
        %v459 = vunpack.c.l.b16 %v435
        %v460 = vunpack.c.h.b16 %v435
        %v461 = vunpack.c.l.b16 %v436
        %v462 = vunpack.c.h.b16 %v436
        %v463 = vunpack.c.l.b16 %v437
        %v464 = vunpack.c.h.b16 %v437
        %v465 = vunpack.c.l.b16 %v438
        %v466 = vunpack.c.h.b16 %v438
        %v467 = vunpack.c.l.b16 %v439
        %v468 = vunpack.c.h.b16 %v439
        %v469 = vunpack.c.l.b16 %v440
        %v470 = vunpack.c.h.b16 %v440
        %v471 = vpack.c.b16 %v457, %v455
        %v472 = vpack.c.b16 %v458, %v456
        %v473 = vpack.c.b16 %v461, %v459
        %v474 = vpack.c.b16 %v462, %v460
        %v475 = vpack.c.b16 %v465, %v463
        %v476 = vpack.c.b16 %v466, %v464
        %v477 = vpack.c.b16 %v469, %v467
        %v478 = vpack.c.b16 %v470, %v468
        %vm487 = vcmask 523264
        %v489 = vsel %vm487, %v432, 0
        %491 = vmatpush.bf16.msra.mxu0 0
        %492 = vmatpush.bf16.msra.mxu0 0
        %493 = vmatpush.bf16.msra.mxu0 0
        %494 = vmatpush.bf16.msra.mxu0 0
        %495 = vmatpush.bf16.msra.mxu0 %v477
        %496 = vmatpush.bf16.msra.mxu0 %v475
        %497 = vmatpush.bf16.msra.mxu0 %v473
        %498 = vmatpush.bf16.msra.mxu0 %v471
        %499 = vmatmul.bf16.gmra.mxu0 %v489
        %v500 = vpop.f32.mrf.mxu0
        %v501 = vadd.f32 %v443, %v500
        %v502 = vpop.f32.mrf.mxu0
        %v503 = vadd.f32 %v443, %v502
        %504 = vdwg.mxu0
        %505 = vmatpush.bf16.msra.mxu0 0
        %506 = vmatpush.bf16.msra.mxu0 0
        %507 = vmatpush.bf16.msra.mxu0 0
        %508 = vmatpush.bf16.msra.mxu0 0
        %509 = vmatpush.bf16.msra.mxu0 %v478
        %510 = vmatpush.bf16.msra.mxu0 %v476
        %511 = vmatpush.bf16.msra.mxu0 %v474
        %512 = vmatpush.bf16.msra.mxu0 %v472
        %513 = vmatmul.bf16.gmra.mxu0 %v489
        %v514 = vpop.f32.mrf.mxu0
        %v515 = vadd.f32 %v444, %v514
        %v516 = vpop.f32.mrf.mxu0
        %v517 = vadd.f32 %v444, %v516
        %518 = vdwg.mxu0
        %v519 = vmul.f32 %v501, 0.35355338
        %v520 = vmul.f32 %v503, 0.35355338
        %v521 = vpack.c.bf16 %v519, %v519
        %v522 = vpack.c.bf16 %v520, %v520
        %527 = vrot.lane.b32.xlu0 %v501, 64
        %v528 = vpop.permute.xlu0 %527
        %529 = vrot.lane.b32.xlu0 %v515, 64
        %v530 = vpop.permute.xlu0 %529
        %531 = vrot.lane.b32.xlu0 %v503, 64
        %v532 = vpop.permute.xlu0 %531
        %533 = vrot.lane.b32.xlu0 %v517, 64
        %v534 = vpop.permute.xlu0 %533
        %v535 = vsel %vm487, %v528, %v530
        %v536 = vsel %vm487, %v532, %v534
        %539 = vxpose.xlu0.b32.start [1/16] %v535, 128
        %540 = vxpose.xlu0.b32.cont [2/16] %v536, 128
        %541 = vxpose.xlu0.b32.cont [3/16] 0.0, 128
        %542 = vxpose.xlu0.b32.cont [4/16] 0.0, 128
        %543 = vxpose.xlu0.b32.cont [5/16] 0.0, 128
        %544 = vxpose.xlu0.b32.cont [6/16] 0.0, 128
        %545 = vxpose.xlu0.b32.cont [7/16] 0.0, 128
        %546 = vxpose.xlu0.b32.cont [8/16] 0.0, 128
        %547 = vxpose.xlu0.b32.cont [9/16] 0.0, 128
        %548 = vxpose.xlu0.b32.cont [10/16] 0.0, 128
        %549 = vxpose.xlu0.b32.cont [11/16] 0.0, 128
        %550 = vxpose.xlu0.b32.cont [12/16] 0.0, 128
        %551 = vxpose.xlu0.b32.cont [13/16] 0.0, 128
        %552 = vxpose.xlu0.b32.cont [14/16] 0.0, 128
        %553 = vxpose.xlu0.b32.cont [15/16] 0.0, 128
        %554 = vxpose.xlu0.b32.end [16/16] 0.0, 128
        %v555 = vpop.trf.xlu0
        %v556 = vpop.trf.xlu0
        %v557 = vpop.trf.xlu0
        %v558 = vpop.trf.xlu0
        %v559 = vpop.trf.xlu0
        %v560 = vpop.trf.xlu0
        %v561 = vpop.trf.xlu0
        %v562 = vpop.trf.xlu0
        %v563 = vpop.trf.xlu0
        %v564 = vpop.trf.xlu0
        %v565 = vpop.trf.xlu0
        %v566 = vpop.trf.xlu0
        %v567 = vpop.trf.xlu0
        %v568 = vpop.trf.xlu0
        %v569 = vpop.trf.xlu0
        %v570 = vpop.trf.xlu0
        %v571 = vpack.c.bf16 %v555, %v555
        %v572 = vpack.c.bf16 %v556, %v556
        %v573 = vpack.c.bf16 %v557, %v557
        %v574 = vpack.c.bf16 %v558, %v558
        %v575 = vpack.c.bf16 %v559, %v559
        %v576 = vpack.c.bf16 %v560, %v560
        %v577 = vpack.c.bf16 %v561, %v561
        %v578 = vpack.c.bf16 %v562, %v562
        %v579 = vpack.c.bf16 %v563, %v563
        %v580 = vpack.c.bf16 %v564, %v564
        %v581 = vpack.c.bf16 %v565, %v565
        %v582 = vpack.c.bf16 %v566, %v566
        %v583 = vpack.c.bf16 %v567, %v567
        %v584 = vpack.c.bf16 %v568, %v568
        %v585 = vpack.c.bf16 %v569, %v569
        %v586 = vpack.c.bf16 %v570, %v570
        %v587 = vlaneseq
        %v588 = vshrl.u32 %v587, 7
        %v589 = vadd.s32 %v588, 8
        %v590 = vlaneseq
        %v591 = vand.u32 %v590, 127
        %vm592 = vcmp.le.s32.totalorder %v591, %v588
        %vm593 = vcmp.le.s32.totalorder %v591, %v589
        %v596 = vunpack.c.l.b16 %v521
        %v597 = vunpack.c.l.b16 %v522
        %v598 = vpack.c.b16 %v597, %v596
        %vm599 = vcmask 64512
        %v601 = vsel %vm599, %v598, 0
        %vm603 = vcmask 1043456
        %v605 = vsel %vm603, %v571, 0
        %607 = vmatpush.bf16.msra.mxu0 0
        %608 = vmatpush.bf16.msra.mxu0 0
        %609 = vmatpush.bf16.msra.mxu0 0
        %610 = vmatpush.bf16.msra.mxu0 0
        %611 = vmatpush.bf16.msra.mxu0 0
        %612 = vmatpush.bf16.msra.mxu0 0
        %613 = vmatpush.bf16.msra.mxu0 0
        %614 = vmatpush.bf16.msra.mxu0 %v605
        %615 = vmatmul.bf16.gmra.mxu0 %v601
        %v616 = vpop.f32.mrf.mxu0
        %v617 = vadd.f32 0.0, %v616
        %v618 = vpop.f32.mrf.mxu0
        %v619 = vadd.f32 0.0, %v618
        %620 = vdwg.mxu0
        %v621 = vsel %vm592, %v617, -1e+30
        %v622 = vsel %vm593, %v619, -1e+30
        %vm623 = vcmask 130048
        %v624 = vsel %vm623, %v621, -inf
        %625 = vmax.xlane.f32.xlu0 %v624
        %v626 = vpop.xlane.xlu0 %625
        %v627 = vsel %vm623, %v622, -inf
        %628 = vmax.xlane.f32.xlu0 %v627
        %v629 = vpop.xlane.xlu0 %628
        %v630 = vsub.f32 %v621, %v626
        %v631 = vsub.f32 %v622, %v629
        %v632 = vmul.f32 %v630, 1.442695
        %v633 = vpow.pop %v632
        %v634 = vmul.f32 %v631, 1.442695
        %v635 = vpow.pop %v634
        %v636 = vsel %vm623, %v633, 0.0
        %637 = vadd.xlane.f32.xlu0 %v636
        %v638 = vpop.xlane.xlu0 %637
        %v639 = vsel %vm623, %v635, 0.0
        %640 = vadd.xlane.f32.xlu0 %v639
        %v641 = vpop.xlane.xlu0 %640
        %v642 = vrcp.pop %v638
        %v643 = vrcp.pop %v641
        %v644 = vmul.f32 %v633, %v642
        %v645 = vmul.f32 %v635, %v643
        %v646 = vpack.c.bf16 %v645, %v644
        %v648 = vsel %vm623, %v579, 0
        %v651 = vsel %vm623, %v646, 0
        %653 = vmatpush.bf16.xpose.msra.mxu0 0
        %654 = vmatpush.bf16.xpose.msra.mxu0 0
        %655 = vmatpush.bf16.xpose.msra.mxu0 0
        %656 = vmatpush.bf16.xpose.msra.mxu0 0
        %657 = vmatpush.bf16.xpose.msra.mxu0 0
        %658 = vmatpush.bf16.xpose.msra.mxu0 0
        %659 = vmatpush.bf16.xpose.msra.mxu0 0
        %660 = vmatpush.bf16.xpose.msra.mxu0 %v651
        %661 = vmatmul.bf16.gmra.mxu0 %v648
        %v662 = vpop.f32.mrf.mxu0
        %v663 = vadd.f32 0.0, %v662
        %v664 = vpop.f32.mrf.mxu0
        %665 = vdwg.mxu0
        %666 = vrot.lane.b32.xlu0 %v598, 120
        %v667 = vpop.permute.xlu0 %666
        %v669 = vsel %vm599, %v667, 0
        %v672 = vsel %vm603, %v572, 0
        %674 = vmatpush.bf16.msra.mxu0 0
        %675 = vmatpush.bf16.msra.mxu0 0
        %676 = vmatpush.bf16.msra.mxu0 0
        %677 = vmatpush.bf16.msra.mxu0 0
        %678 = vmatpush.bf16.msra.mxu0 0
        %679 = vmatpush.bf16.msra.mxu0 0
        %680 = vmatpush.bf16.msra.mxu0 0
        %681 = vmatpush.bf16.msra.mxu0 %v672
        %682 = vmatmul.bf16.gmra.mxu0 %v669
        %v683 = vpop.f32.mrf.mxu0
        %v684 = vadd.f32 0.0, %v683
        %v685 = vpop.f32.mrf.mxu0
        %v686 = vadd.f32 0.0, %v685
        %687 = vdwg.mxu0
        %v688 = vsel %vm592, %v684, -1e+30
        %v689 = vsel %vm593, %v686, -1e+30
        %v690 = vsel %vm623, %v688, -inf
        %691 = vmax.xlane.f32.xlu0 %v690
        %v692 = vpop.xlane.xlu0 %691
        %v693 = vsel %vm623, %v689, -inf
        %694 = vmax.xlane.f32.xlu0 %v693
        %v695 = vpop.xlane.xlu0 %694
        %v696 = vsub.f32 %v688, %v692
        %v697 = vsub.f32 %v689, %v695
        %v698 = vmul.f32 %v696, 1.442695
        %v699 = vpow.pop %v698
        %v700 = vmul.f32 %v697, 1.442695
        %v701 = vpow.pop %v700
        %v702 = vsel %vm623, %v699, 0.0
        %703 = vadd.xlane.f32.xlu0 %v702
        %v704 = vpop.xlane.xlu0 %703
        %v705 = vsel %vm623, %v701, 0.0
        %706 = vadd.xlane.f32.xlu0 %v705
        %v707 = vpop.xlane.xlu0 %706
        %v708 = vrcp.pop %v704
        %v709 = vrcp.pop %v707
        %v710 = vmul.f32 %v699, %v708
        %v711 = vmul.f32 %v701, %v709
        %v712 = vpack.c.bf16 %v711, %v710
        %v714 = vsel %vm623, %v580, 0
        %v717 = vsel %vm623, %v712, 0
        %719 = vmatpush.bf16.xpose.msra.mxu0 0
        %720 = vmatpush.bf16.xpose.msra.mxu0 0
        %721 = vmatpush.bf16.xpose.msra.mxu0 0
        %722 = vmatpush.bf16.xpose.msra.mxu0 0
        %723 = vmatpush.bf16.xpose.msra.mxu0 0
        %724 = vmatpush.bf16.xpose.msra.mxu0 0
        %725 = vmatpush.bf16.xpose.msra.mxu0 0
        %726 = vmatpush.bf16.xpose.msra.mxu0 %v717
        %727 = vmatmul.bf16.gmra.mxu0 %v714
        %v728 = vpop.f32.mrf.mxu0
        %v729 = vadd.f32 0.0, %v728
        %v730 = vpop.f32.mrf.mxu0
        %731 = vdwg.mxu0
        %732 = vrot.lane.b32.xlu0 %v598, 112
        %v733 = vpop.permute.xlu0 %732
        %v735 = vsel %vm599, %v733, 0
        %v738 = vsel %vm603, %v573, 0
        %740 = vmatpush.bf16.msra.mxu0 0
        %741 = vmatpush.bf16.msra.mxu0 0
        %742 = vmatpush.bf16.msra.mxu0 0
        %743 = vmatpush.bf16.msra.mxu0 0
        %744 = vmatpush.bf16.msra.mxu0 0
        %745 = vmatpush.bf16.msra.mxu0 0
        %746 = vmatpush.bf16.msra.mxu0 0
        %747 = vmatpush.bf16.msra.mxu0 %v738
        %748 = vmatmul.bf16.gmra.mxu0 %v735
        %v749 = vpop.f32.mrf.mxu0
        %v750 = vadd.f32 0.0, %v749
        %v751 = vpop.f32.mrf.mxu0
        %v752 = vadd.f32 0.0, %v751
        %753 = vdwg.mxu0
        %v754 = vsel %vm592, %v750, -1e+30
        %v755 = vsel %vm593, %v752, -1e+30
        %v756 = vsel %vm623, %v754, -inf
        %757 = vmax.xlane.f32.xlu0 %v756
        %v758 = vpop.xlane.xlu0 %757
        %v759 = vsel %vm623, %v755, -inf
        %760 = vmax.xlane.f32.xlu0 %v759
        %v761 = vpop.xlane.xlu0 %760
        %v762 = vsub.f32 %v754, %v758
        %v763 = vsub.f32 %v755, %v761
        %v764 = vmul.f32 %v762, 1.442695
        %v765 = vpow.pop %v764
        %v766 = vmul.f32 %v763, 1.442695
        %v767 = vpow.pop %v766
        %v768 = vsel %vm623, %v765, 0.0
        %769 = vadd.xlane.f32.xlu0 %v768
        %v770 = vpop.xlane.xlu0 %769
        %v771 = vsel %vm623, %v767, 0.0
        %772 = vadd.xlane.f32.xlu0 %v771
        %v773 = vpop.xlane.xlu0 %772
        %v774 = vrcp.pop %v770
        %v775 = vrcp.pop %v773
        %v776 = vmul.f32 %v765, %v774
        %v777 = vmul.f32 %v767, %v775
        %v778 = vpack.c.bf16 %v777, %v776
        %v780 = vsel %vm623, %v581, 0
        %v783 = vsel %vm623, %v778, 0
        %785 = vmatpush.bf16.xpose.msra.mxu0 0
        %786 = vmatpush.bf16.xpose.msra.mxu0 0
        %787 = vmatpush.bf16.xpose.msra.mxu0 0
        %788 = vmatpush.bf16.xpose.msra.mxu0 0
        %789 = vmatpush.bf16.xpose.msra.mxu0 0
        %790 = vmatpush.bf16.xpose.msra.mxu0 0
        %791 = vmatpush.bf16.xpose.msra.mxu0 0
        %792 = vmatpush.bf16.xpose.msra.mxu0 %v783
        %793 = vmatmul.bf16.gmra.mxu0 %v780
        %v794 = vpop.f32.mrf.mxu0
        %v795 = vadd.f32 0.0, %v794
        %v796 = vpop.f32.mrf.mxu0
        %797 = vdwg.mxu0
        %798 = vrot.lane.b32.xlu0 %v598, 104
        %v799 = vpop.permute.xlu0 %798
        %v801 = vsel %vm599, %v799, 0
        %v804 = vsel %vm603, %v574, 0
        %806 = vmatpush.bf16.msra.mxu0 0
        %807 = vmatpush.bf16.msra.mxu0 0
        %808 = vmatpush.bf16.msra.mxu0 0
        %809 = vmatpush.bf16.msra.mxu0 0
        %810 = vmatpush.bf16.msra.mxu0 0
        %811 = vmatpush.bf16.msra.mxu0 0
        %812 = vmatpush.bf16.msra.mxu0 0
        %813 = vmatpush.bf16.msra.mxu0 %v804
        %814 = vmatmul.bf16.gmra.mxu0 %v801
        %v815 = vpop.f32.mrf.mxu0
        %v816 = vadd.f32 0.0, %v815
        %v817 = vpop.f32.mrf.mxu0
        %v818 = vadd.f32 0.0, %v817
        %819 = vdwg.mxu0
        %v820 = vsel %vm592, %v816, -1e+30
        %v821 = vsel %vm593, %v818, -1e+30
        %v822 = vsel %vm623, %v820, -inf
        %823 = vmax.xlane.f32.xlu0 %v822
        %v824 = vpop.xlane.xlu0 %823
        %v825 = vsel %vm623, %v821, -inf
        %826 = vmax.xlane.f32.xlu0 %v825
        %v827 = vpop.xlane.xlu0 %826
        %v828 = vsub.f32 %v820, %v824
        %v829 = vsub.f32 %v821, %v827
        %v830 = vmul.f32 %v828, 1.442695
        %v831 = vpow.pop %v830
        %v832 = vmul.f32 %v829, 1.442695
        %v833 = vpow.pop %v832
        %v834 = vsel %vm623, %v831, 0.0
        %835 = vadd.xlane.f32.xlu0 %v834
        %v836 = vpop.xlane.xlu0 %835
        %v837 = vsel %vm623, %v833, 0.0
        %838 = vadd.xlane.f32.xlu0 %v837
        %v839 = vpop.xlane.xlu0 %838
        %v840 = vrcp.pop %v836
        %v841 = vrcp.pop %v839
        %v842 = vmul.f32 %v831, %v840
        %v843 = vmul.f32 %v833, %v841
        %v844 = vpack.c.bf16 %v843, %v842
        %v846 = vsel %vm623, %v582, 0
        %v849 = vsel %vm623, %v844, 0
        %851 = vmatpush.bf16.xpose.msra.mxu0 0
        %852 = vmatpush.bf16.xpose.msra.mxu0 0
        %853 = vmatpush.bf16.xpose.msra.mxu0 0
        %854 = vmatpush.bf16.xpose.msra.mxu0 0
        %855 = vmatpush.bf16.xpose.msra.mxu0 0
        %856 = vmatpush.bf16.xpose.msra.mxu0 0
        %857 = vmatpush.bf16.xpose.msra.mxu0 0
        %858 = vmatpush.bf16.xpose.msra.mxu0 %v849
        %859 = vmatmul.bf16.gmra.mxu0 %v846
        %v860 = vpop.f32.mrf.mxu0
        %v861 = vadd.f32 0.0, %v860
        %v862 = vpop.f32.mrf.mxu0
        %863 = vdwg.mxu0
        %864 = vrot.lane.b32.xlu0 %v598, 96
        %v865 = vpop.permute.xlu0 %864
        %v867 = vsel %vm599, %v865, 0
        %v870 = vsel %vm603, %v575, 0
        %872 = vmatpush.bf16.msra.mxu0 0
        %873 = vmatpush.bf16.msra.mxu0 0
        %874 = vmatpush.bf16.msra.mxu0 0
        %875 = vmatpush.bf16.msra.mxu0 0
        %876 = vmatpush.bf16.msra.mxu0 0
        %877 = vmatpush.bf16.msra.mxu0 0
        %878 = vmatpush.bf16.msra.mxu0 0
        %879 = vmatpush.bf16.msra.mxu0 %v870
        %880 = vmatmul.bf16.gmra.mxu0 %v867
        %v881 = vpop.f32.mrf.mxu0
        %v882 = vadd.f32 0.0, %v881
        %v883 = vpop.f32.mrf.mxu0
        %v884 = vadd.f32 0.0, %v883
        %885 = vdwg.mxu0
        %v886 = vsel %vm592, %v882, -1e+30
        %v887 = vsel %vm593, %v884, -1e+30
        %v888 = vsel %vm623, %v886, -inf
        %889 = vmax.xlane.f32.xlu0 %v888
        %v890 = vpop.xlane.xlu0 %889
        %v891 = vsel %vm623, %v887, -inf
        %892 = vmax.xlane.f32.xlu0 %v891
        %v893 = vpop.xlane.xlu0 %892
        %v894 = vsub.f32 %v886, %v890
        %v895 = vsub.f32 %v887, %v893
        %v896 = vmul.f32 %v894, 1.442695
        %v897 = vpow.pop %v896
        %v898 = vmul.f32 %v895, 1.442695
        %v899 = vpow.pop %v898
        %v900 = vsel %vm623, %v897, 0.0
        %901 = vadd.xlane.f32.xlu0 %v900
        %v902 = vpop.xlane.xlu0 %901
        %v903 = vsel %vm623, %v899, 0.0
        %904 = vadd.xlane.f32.xlu0 %v903
        %v905 = vpop.xlane.xlu0 %904
        %v906 = vrcp.pop %v902
        %v907 = vrcp.pop %v905
        %v908 = vmul.f32 %v897, %v906
        %v909 = vmul.f32 %v899, %v907
        %v910 = vpack.c.bf16 %v909, %v908
        %v912 = vsel %vm623, %v583, 0
        %v915 = vsel %vm623, %v910, 0
        %917 = vmatpush.bf16.xpose.msra.mxu0 0
        %918 = vmatpush.bf16.xpose.msra.mxu0 0
        %919 = vmatpush.bf16.xpose.msra.mxu0 0
        %920 = vmatpush.bf16.xpose.msra.mxu0 0
        %921 = vmatpush.bf16.xpose.msra.mxu0 0
        %922 = vmatpush.bf16.xpose.msra.mxu0 0
        %923 = vmatpush.bf16.xpose.msra.mxu0 0
        %924 = vmatpush.bf16.xpose.msra.mxu0 %v915
        %925 = vmatmul.bf16.gmra.mxu0 %v912
        %v926 = vpop.f32.mrf.mxu0
        %v927 = vadd.f32 0.0, %v926
        %v928 = vpop.f32.mrf.mxu0
        %929 = vdwg.mxu0
        %930 = vrot.lane.b32.xlu0 %v598, 88
        %v931 = vpop.permute.xlu0 %930
        %v933 = vsel %vm599, %v931, 0
        %v936 = vsel %vm603, %v576, 0
        %938 = vmatpush.bf16.msra.mxu0 0
        %939 = vmatpush.bf16.msra.mxu0 0
        %940 = vmatpush.bf16.msra.mxu0 0
        %941 = vmatpush.bf16.msra.mxu0 0
        %942 = vmatpush.bf16.msra.mxu0 0
        %943 = vmatpush.bf16.msra.mxu0 0
        %944 = vmatpush.bf16.msra.mxu0 0
        %945 = vmatpush.bf16.msra.mxu0 %v936
        %946 = vmatmul.bf16.gmra.mxu0 %v933
        %v947 = vpop.f32.mrf.mxu0
        %v948 = vadd.f32 0.0, %v947
        %v949 = vpop.f32.mrf.mxu0
        %v950 = vadd.f32 0.0, %v949
        %951 = vdwg.mxu0
        %v952 = vsel %vm592, %v948, -1e+30
        %v953 = vsel %vm593, %v950, -1e+30
        %v954 = vsel %vm623, %v952, -inf
        %955 = vmax.xlane.f32.xlu0 %v954
        %v956 = vpop.xlane.xlu0 %955
        %v957 = vsel %vm623, %v953, -inf
        %958 = vmax.xlane.f32.xlu0 %v957
        %v959 = vpop.xlane.xlu0 %958
        %v960 = vsub.f32 %v952, %v956
        %v961 = vsub.f32 %v953, %v959
        %v962 = vmul.f32 %v960, 1.442695
        %v963 = vpow.pop %v962
        %v964 = vmul.f32 %v961, 1.442695
        %v965 = vpow.pop %v964
        %v966 = vsel %vm623, %v963, 0.0
        %967 = vadd.xlane.f32.xlu0 %v966
        %v968 = vpop.xlane.xlu0 %967
        %v969 = vsel %vm623, %v965, 0.0
        %970 = vadd.xlane.f32.xlu0 %v969
        %v971 = vpop.xlane.xlu0 %970
        %v972 = vrcp.pop %v968
        %v973 = vrcp.pop %v971
        %v974 = vmul.f32 %v963, %v972
        %v975 = vmul.f32 %v965, %v973
        %v976 = vpack.c.bf16 %v975, %v974
        %v978 = vsel %vm623, %v584, 0
        %v981 = vsel %vm623, %v976, 0
        %983 = vmatpush.bf16.xpose.msra.mxu0 0
        %984 = vmatpush.bf16.xpose.msra.mxu0 0
        %985 = vmatpush.bf16.xpose.msra.mxu0 0
        %986 = vmatpush.bf16.xpose.msra.mxu0 0
        %987 = vmatpush.bf16.xpose.msra.mxu0 0
        %988 = vmatpush.bf16.xpose.msra.mxu0 0
        %989 = vmatpush.bf16.xpose.msra.mxu0 0
        %990 = vmatpush.bf16.xpose.msra.mxu0 %v981
        %991 = vmatmul.bf16.gmra.mxu0 %v978
        %v992 = vpop.f32.mrf.mxu0
        %v993 = vadd.f32 0.0, %v992
        %v994 = vpop.f32.mrf.mxu0
        %995 = vdwg.mxu0
        %996 = vrot.lane.b32.xlu0 %v598, 80
        %v997 = vpop.permute.xlu0 %996
        %v999 = vsel %vm599, %v997, 0
        %v1002 = vsel %vm603, %v577, 0
        %1004 = vmatpush.bf16.msra.mxu0 0
        %1005 = vmatpush.bf16.msra.mxu0 0
        %1006 = vmatpush.bf16.msra.mxu0 0
        %1007 = vmatpush.bf16.msra.mxu0 0
        %1008 = vmatpush.bf16.msra.mxu0 0
        %1009 = vmatpush.bf16.msra.mxu0 0
        %1010 = vmatpush.bf16.msra.mxu0 0
        %1011 = vmatpush.bf16.msra.mxu0 %v1002
        %1012 = vmatmul.bf16.gmra.mxu0 %v999
        %v1013 = vpop.f32.mrf.mxu0
        %v1014 = vadd.f32 0.0, %v1013
        %v1015 = vpop.f32.mrf.mxu0
        %v1016 = vadd.f32 0.0, %v1015
        %1017 = vdwg.mxu0
        %v1018 = vsel %vm592, %v1014, -1e+30
        %v1019 = vsel %vm593, %v1016, -1e+30
        %v1020 = vsel %vm623, %v1018, -inf
        %1021 = vmax.xlane.f32.xlu0 %v1020
        %v1022 = vpop.xlane.xlu0 %1021
        %v1023 = vsel %vm623, %v1019, -inf
        %1024 = vmax.xlane.f32.xlu0 %v1023
        %v1025 = vpop.xlane.xlu0 %1024
        %v1026 = vsub.f32 %v1018, %v1022
        %v1027 = vsub.f32 %v1019, %v1025
        %v1028 = vmul.f32 %v1026, 1.442695
        %v1029 = vpow.pop %v1028
        %v1030 = vmul.f32 %v1027, 1.442695
        %v1031 = vpow.pop %v1030
        %v1032 = vsel %vm623, %v1029, 0.0
        %1033 = vadd.xlane.f32.xlu0 %v1032
        %v1034 = vpop.xlane.xlu0 %1033
        %v1035 = vsel %vm623, %v1031, 0.0
        %1036 = vadd.xlane.f32.xlu0 %v1035
        %v1037 = vpop.xlane.xlu0 %1036
        %v1038 = vrcp.pop %v1034
        %v1039 = vrcp.pop %v1037
        %v1040 = vmul.f32 %v1029, %v1038
        %v1041 = vmul.f32 %v1031, %v1039
        %v1042 = vpack.c.bf16 %v1041, %v1040
        %v1044 = vsel %vm623, %v585, 0
        %v1047 = vsel %vm623, %v1042, 0
        %1049 = vmatpush.bf16.xpose.msra.mxu0 0
        %1050 = vmatpush.bf16.xpose.msra.mxu0 0
        %1051 = vmatpush.bf16.xpose.msra.mxu0 0
        %1052 = vmatpush.bf16.xpose.msra.mxu0 0
        %1053 = vmatpush.bf16.xpose.msra.mxu0 0
        %1054 = vmatpush.bf16.xpose.msra.mxu0 0
        %1055 = vmatpush.bf16.xpose.msra.mxu0 0
        %1056 = vmatpush.bf16.xpose.msra.mxu0 %v1047
        %1057 = vmatmul.bf16.gmra.mxu0 %v1044
        %v1058 = vpop.f32.mrf.mxu0
        %v1059 = vadd.f32 0.0, %v1058
        %v1060 = vpop.f32.mrf.mxu0
        %1061 = vdwg.mxu0
        %1062 = vrot.lane.b32.xlu0 %v598, 72
        %v1063 = vpop.permute.xlu0 %1062
        %v1065 = vsel %vm599, %v1063, 0
        %v1068 = vsel %vm603, %v578, 0
        %1070 = vmatpush.bf16.msra.mxu0 0
        %1071 = vmatpush.bf16.msra.mxu0 0
        %1072 = vmatpush.bf16.msra.mxu0 0
        %1073 = vmatpush.bf16.msra.mxu0 0
        %1074 = vmatpush.bf16.msra.mxu0 0
        %1075 = vmatpush.bf16.msra.mxu0 0
        %1076 = vmatpush.bf16.msra.mxu0 0
        %1077 = vmatpush.bf16.msra.mxu0 %v1068
        %1078 = vmatmul.bf16.gmra.mxu0 %v1065
        %v1079 = vpop.f32.mrf.mxu0
        %v1080 = vadd.f32 0.0, %v1079
        %v1081 = vpop.f32.mrf.mxu0
        %v1082 = vadd.f32 0.0, %v1081
        %1083 = vdwg.mxu0
        %v1084 = vsel %vm592, %v1080, -1e+30
        %v1085 = vsel %vm593, %v1082, -1e+30
        %v1086 = vsel %vm623, %v1084, -inf
        %1087 = vmax.xlane.f32.xlu0 %v1086
        %v1088 = vpop.xlane.xlu0 %1087
        %v1089 = vsel %vm623, %v1085, -inf
        %1090 = vmax.xlane.f32.xlu0 %v1089
        %v1091 = vpop.xlane.xlu0 %1090
        %v1092 = vsub.f32 %v1084, %v1088
        %v1093 = vsub.f32 %v1085, %v1091
        %v1094 = vmul.f32 %v1092, 1.442695
        %v1095 = vpow.pop %v1094
        %v1096 = vmul.f32 %v1093, 1.442695
        %v1097 = vpow.pop %v1096
        %v1098 = vsel %vm623, %v1095, 0.0
        %1099 = vadd.xlane.f32.xlu0 %v1098
        %v1100 = vpop.xlane.xlu0 %1099
        %v1101 = vsel %vm623, %v1097, 0.0
        %1102 = vadd.xlane.f32.xlu0 %v1101
        %v1103 = vpop.xlane.xlu0 %1102
        %v1104 = vrcp.pop %v1100
        %v1105 = vrcp.pop %v1103
        %v1106 = vmul.f32 %v1095, %v1104
        %v1107 = vmul.f32 %v1097, %v1105
        %v1108 = vpack.c.bf16 %v1107, %v1106
        %v1110 = vsel %vm623, %v586, 0
        %v1113 = vsel %vm623, %v1108, 0
        %1115 = vmatpush.bf16.xpose.msra.mxu0 0
        %1116 = vmatpush.bf16.xpose.msra.mxu0 0
        %1117 = vmatpush.bf16.xpose.msra.mxu0 0
        %1118 = vmatpush.bf16.xpose.msra.mxu0 0
        %1119 = vmatpush.bf16.xpose.msra.mxu0 0
        %1120 = vmatpush.bf16.xpose.msra.mxu0 0
        %1121 = vmatpush.bf16.xpose.msra.mxu0 0
        %1122 = vmatpush.bf16.xpose.msra.mxu0 %v1113
        %1123 = vmatmul.bf16.gmra.mxu0 %v1110
        %v1124 = vpop.f32.mrf.mxu0
        %v1125 = vadd.f32 0.0, %v1124
        %v1126 = vpop.f32.mrf.mxu0
        %1127 = vdwg.mxu0
        %1128 = vxpose.xlu0.b32.start [1/16] %v663, 128
        %1129 = vxpose.xlu0.b32.cont [2/16] %v729, 128
        %1130 = vxpose.xlu0.b32.cont [3/16] %v795, 128
        %1131 = vxpose.xlu0.b32.cont [4/16] %v861, 128
        %1132 = vxpose.xlu0.b32.cont [5/16] %v927, 128
        %1133 = vxpose.xlu0.b32.cont [6/16] %v993, 128
        %1134 = vxpose.xlu0.b32.cont [7/16] %v1059, 128
        %1135 = vxpose.xlu0.b32.cont [8/16] %v1125, 128
        %1136 = vxpose.xlu0.b32.cont [9/16] 0.0, 128
        %1137 = vxpose.xlu0.b32.cont [10/16] 0.0, 128
        %1138 = vxpose.xlu0.b32.cont [11/16] 0.0, 128
        %1139 = vxpose.xlu0.b32.cont [12/16] 0.0, 128
        %1140 = vxpose.xlu0.b32.cont [13/16] 0.0, 128
        %1141 = vxpose.xlu0.b32.cont [14/16] 0.0, 128
        %1142 = vxpose.xlu0.b32.cont [15/16] 0.0, 128
        %1143 = vxpose.xlu0.b32.end [16/16] 0.0, 128
        %v1144 = vpop.trf.xlu0
        %v1145 = vpop.trf.xlu0
        %v1146 = vpop.trf.xlu0
        %v1147 = vpop.trf.xlu0
        %v1148 = vpop.trf.xlu0
        %v1149 = vpop.trf.xlu0
        %v1150 = vpop.trf.xlu0
        %v1151 = vpop.trf.xlu0
        %v1152 = vpop.trf.xlu0
        %v1153 = vpop.trf.xlu0
        %v1154 = vpop.trf.xlu0
        %v1155 = vpop.trf.xlu0
        %v1156 = vpop.trf.xlu0
        %v1157 = vpop.trf.xlu0
        %v1158 = vpop.trf.xlu0
        %v1159 = vpop.trf.xlu0
        %v1160 = vpack.c.bf16 %v1145, %v1144
        %v1161 = vld [vmem:[%s3] sm:$0xf]
        %v1162 = vld [vmem:[%s3 + $0x4] sm:$0xf]
        %v1163 = vld [vmem:[%s3 + $0x8] sm:$0xf]
        %v1164 = vld [vmem:[%s3 + $0xc] sm:$0xf]
        %v1165 = vld [vmem:[%s3 + $0x10] sm:$0xf]
        %v1166 = vld [vmem:[%s3 + $0x14] sm:$0xf]
        %v1167 = vld [vmem:[%s3 + $0x18] sm:$0xf]
        %v1168 = vld [vmem:[%s3 + $0x1c] sm:$0xf]
        %v1169 = vld [vmem:[#allocation5] sm:$0x1]
        %v1171 = vperm.slane %v1169, 0
        %v1181 = vunpack.c.l.b16 %v1161
        %v1182 = vunpack.c.l.b16 %v1162
        %v1183 = vunpack.c.l.b16 %v1163
        %v1184 = vunpack.c.l.b16 %v1164
        %v1185 = vunpack.c.l.b16 %v1165
        %v1186 = vunpack.c.l.b16 %v1166
        %v1187 = vunpack.c.l.b16 %v1167
        %v1188 = vunpack.c.l.b16 %v1168
        %v1189 = vpack.c.b16 %v1182, %v1181
        %v1190 = vpack.c.b16 %v1184, %v1183
        %v1191 = vpack.c.b16 %v1186, %v1185
        %v1192 = vpack.c.b16 %v1188, %v1187
        %v1198 = vsel %vm487, %v1160, 0
        %1200 = vmatpush.bf16.msra.mxu0 0
        %1201 = vmatpush.bf16.msra.mxu0 0
        %1202 = vmatpush.bf16.msra.mxu0 0
        %1203 = vmatpush.bf16.msra.mxu0 0
        %1204 = vmatpush.bf16.msra.mxu0 %v1192
        %1205 = vmatpush.bf16.msra.mxu0 %v1191
        %1206 = vmatpush.bf16.msra.mxu0 %v1190
        %1207 = vmatpush.bf16.msra.mxu0 %v1189
        %1208 = vmatmul.bf16.gmra.mxu0 %v1198
        %v1209 = vpop.f32.mrf.mxu0
        %v1210 = vadd.f32 %v1171, %v1209
        %v1211 = vpop.f32.mrf.mxu0
        %v1212 = vadd.f32 %v1171, %v1211
        %1213 = vdwg.mxu0
        %v1214 = vadd.f32 %v1210, %v430
        %v1215 = vadd.f32 %v1212, %v431
        %v1216 = vsel %vm487, %v1214, 0.0
        %1217 = vadd.xlane.f32.xlu0 %v1216
        %v1218 = vpop.xlane.xlu0 %1217
        %v1219 = vsel %vm487, %v1215, 0.0
        %1220 = vadd.xlane.f32.xlu0 %v1219
        %v1221 = vpop.xlane.xlu0 %1220
        %v1222 = vrcp.pop 64.0
        %v1223 = vmul.f32 64.0, %v1222
        %v1224 = vsub.f32 1.0, %v1223
        %v1225 = vmul.f32 %v1222, %v1224
        %v1226 = vadd.f32 %v1222, %v1225
        %vm1227 = vweird.f32 %v1222
        %v1228 = vsel %vm1227, %v1222, %v1226
        %v1229 = vmul.f32 %v1218, %v1228
        %v1230 = vmul.f32 %v1221, %v1228
        %v1231 = vsub.f32 %v1214, %v1229
        %v1232 = vsub.f32 %v1215, %v1230
        %v1233 = vmul.f32 %v1231, %v1231
        %v1234 = vmul.f32 %v1232, %v1232
        %v1235 = vsel %vm487, %v1233, 0.0
        %1236 = vadd.xlane.f32.xlu0 %v1235
        %v1237 = vpop.xlane.xlu0 %1236
        %v1238 = vsel %vm487, %v1234, 0.0
        %1239 = vadd.xlane.f32.xlu0 %v1238
        %v1240 = vpop.xlane.xlu0 %1239
        %v1241 = vmul.f32 %v1237, %v1228
        %v1242 = vmul.f32 %v1240, %v1228
        %v1243 = vadd.f32 %v1241, 1e-05
        %v1244 = vadd.f32 %v1242, 1e-05
        %v1245 = vrsqrt.pop %v1243
        %v1246 = vmul.f32 %v1245, %v1243
        %v1247 = vmul.f32 %v1246, %v1245
        %v1248 = vmul.f32 0.5, %v1247
        %v1249 = vsub.f32 1.5, %v1248
        %v1250 = vmul.f32 %v1245, %v1249
        %vm1251 = vweird.f32 %v1243
        %vm1252 = vweird.f32 %v1245
        %vm1253 = vmor %vm1251, %vm1252
        %v1254 = vsel %vm1253, %v1245, %v1250
        %v1255 = vrsqrt.pop %v1244
        %v1256 = vmul.f32 %v1255, %v1244
        %v1257 = vmul.f32 %v1256, %v1255
        %v1258 = vmul.f32 0.5, %v1257
        %v1259 = vsub.f32 1.5, %v1258
        %v1260 = vmul.f32 %v1255, %v1259
        %vm1261 = vweird.f32 %v1244
        %vm1262 = vweird.f32 %v1255
        %vm1263 = vmor %vm1261, %vm1262
        %v1264 = vsel %vm1263, %v1255, %v1260
        %v1265 = vmul.f32 %v1231, %v1254
        %v1266 = vmul.f32 %v1232, %v1264
        %v1267 = vld [vmem:[#allocation7] sm:$0x1]
        %v1269 = vperm.slane %v1267, 0
        %v1271 = vmul.f32 %v1265, %v1269
        %v1272 = vmul.f32 %v1266, %v1269
        %v1273 = vld [vmem:[%s6] sm:$0x1]
        %v1275 = vperm.slane %v1273, 0
        %v1277 = vadd.f32 %v1271, %v1275
        %v1278 = vadd.f32 %v1272, %v1275
        %v1279 = vpack.c.bf16 %v1278, %v1277
        %v1280 = vld [vmem:[%s7] sm:$0xff]
        %v1281 = vld [vmem:[%s7 + $0x8] sm:$0xff]
        %v1282 = vld [vmem:[%s7 + $0x10] sm:$0xff]
        %v1283 = vld [vmem:[%s7 + $0x18] sm:$0xff]
        %v1284 = vld [vmem:[%s7 + $0x20] sm:$0xff]
        %v1285 = vld [vmem:[%s7 + $0x28] sm:$0xff]
        %v1286 = vld [vmem:[%s7 + $0x30] sm:$0xff]
        %v1287 = vld [vmem:[%s7 + $0x38] sm:$0xff]
        %v1288 = vld [vmem:[%s8] sm:$0x3]
        %v1290 = vperm.slane %v1288, 0
        %v1291 = vperm.slane %v1288, 1
        %v1302 = vunpack.c.l.b16 %v1280
        %v1303 = vunpack.c.h.b16 %v1280
        %v1304 = vunpack.c.l.b16 %v1281
        %v1305 = vunpack.c.h.b16 %v1281
        %v1306 = vunpack.c.l.b16 %v1282
        %v1307 = vunpack.c.h.b16 %v1282
        %v1308 = vunpack.c.l.b16 %v1283
        %v1309 = vunpack.c.h.b16 %v1283
        %v1310 = vunpack.c.l.b16 %v1284
        %v1311 = vunpack.c.h.b16 %v1284
        %v1312 = vunpack.c.l.b16 %v1285
        %v1313 = vunpack.c.h.b16 %v1285
        %v1314 = vunpack.c.l.b16 %v1286
        %v1315 = vunpack.c.h.b16 %v1286
        %v1316 = vunpack.c.l.b16 %v1287
        %v1317 = vunpack.c.h.b16 %v1287
        %v1318 = vpack.c.b16 %v1304, %v1302
        %v1319 = vpack.c.b16 %v1305, %v1303
        %v1320 = vpack.c.b16 %v1308, %v1306
        %v1321 = vpack.c.b16 %v1309, %v1307
        %v1322 = vpack.c.b16 %v1312, %v1310
        %v1323 = vpack.c.b16 %v1313, %v1311
        %v1324 = vpack.c.b16 %v1316, %v1314
        %v1325 = vpack.c.b16 %v1317, %v1315
        %v1335 = vsel %vm487, %v1279, 0
        %1337 = vmatpush.bf16.msra.mxu0 0
        %1338 = vmatpush.bf16.msra.mxu0 0
        %1339 = vmatpush.bf16.msra.mxu0 0
        %1340 = vmatpush.bf16.msra.mxu0 0
        %1341 = vmatpush.bf16.msra.mxu0 %v1324
        %1342 = vmatpush.bf16.msra.mxu0 %v1322
        %1343 = vmatpush.bf16.msra.mxu0 %v1320
        %1344 = vmatpush.bf16.msra.mxu0 %v1318
        %1345 = vmatmul.bf16.gmra.mxu0 %v1335
        %v1346 = vpop.f32.mrf.mxu0
        %v1347 = vadd.f32 %v1290, %v1346
        %v1348 = vpop.f32.mrf.mxu0
        %v1349 = vadd.f32 %v1290, %v1348
        %1350 = vdwg.mxu0
        %1351 = vmatpush.bf16.msra.mxu0 0
        %1352 = vmatpush.bf16.msra.mxu0 0
        %1353 = vmatpush.bf16.msra.mxu0 0
        %1354 = vmatpush.bf16.msra.mxu0 0
        %1355 = vmatpush.bf16.msra.mxu0 %v1325
        %1356 = vmatpush.bf16.msra.mxu0 %v1323
        %1357 = vmatpush.bf16.msra.mxu0 %v1321
        %1358 = vmatpush.bf16.msra.mxu0 %v1319
        %1359 = vmatmul.bf16.gmra.mxu0 %v1335
        %v1360 = vpop.f32.mrf.mxu0
        %v1361 = vadd.f32 %v1291, %v1360
        %v1362 = vpop.f32.mrf.mxu0
        %v1363 = vadd.f32 %v1291, %v1362
        %1364 = vdwg.mxu0
        %vm1365 = vcmp.gt.f32.partialorder %v1347, 0.0
        %vm1366 = vcmp.gt.f32.partialorder %v1361, 0.0
        %vm1367 = vcmp.gt.f32.partialorder %v1349, 0.0
        %vm1368 = vcmp.gt.f32.partialorder %v1363, 0.0
        %v1369 = vmul.f32 %v1347, 0.01
        %v1370 = vmul.f32 %v1361, 0.01
        %v1371 = vmul.f32 %v1349, 0.01
        %v1372 = vmul.f32 %v1363, 0.01
        %v1373 = vsel %vm1365, %v1347, %v1369
        %v1374 = vsel %vm1366, %v1361, %v1370
        %v1375 = vsel %vm1367, %v1349, %v1371
        %v1376 = vsel %vm1368, %v1363, %v1372
        %v1377 = vpack.c.bf16 %v1375, %v1373
        %v1378 = vpack.c.bf16 %v1376, %v1374
        %v1379 = vld [vmem:[%s9] sm:$0xf]
        %v1380 = vld [vmem:[%s9 + $0x4] sm:$0xf]
        %v1381 = vld [vmem:[%s9 + $0x8] sm:$0xf]
        %v1382 = vld [vmem:[%s9 + $0xc] sm:$0xf]
        %v1383 = vld [vmem:[%s9 + $0x10] sm:$0xf]
        %v1384 = vld [vmem:[%s9 + $0x14] sm:$0xf]
        %v1385 = vld [vmem:[%s9 + $0x18] sm:$0xf]
        %v1386 = vld [vmem:[%s9 + $0x1c] sm:$0xf]
        %v1387 = vld [vmem:[%s9 + $0x20] sm:$0xf]
        %v1388 = vld [vmem:[%s9 + $0x24] sm:$0xf]
        %v1389 = vld [vmem:[%s9 + $0x28] sm:$0xf]
        %v1390 = vld [vmem:[%s9 + $0x2c] sm:$0xf]
        %v1391 = vld [vmem:[%s9 + $0x30] sm:$0xf]
        %v1392 = vld [vmem:[%s9 + $0x34] sm:$0xf]
        %v1393 = vld [vmem:[%s9 + $0x38] sm:$0xf]
        %v1394 = vld [vmem:[%s9 + $0x3c] sm:$0xf]
        %v1395 = vld [vmem:[%s9 + $0x40] sm:$0xf]
        %v1396 = vld [vmem:[%s9 + $0x44] sm:$0xf]
        %v1397 = vld [vmem:[%s9 + $0x48] sm:$0xf]
        %v1398 = vld [vmem:[%s9 + $0x4c] sm:$0xf]
        %v1399 = vld [vmem:[%s9 + $0x50] sm:$0xf]
        %v1400 = vld [vmem:[%s9 + $0x54] sm:$0xf]
        %v1401 = vld [vmem:[%s9 + $0x58] sm:$0xf]
        %v1402 = vld [vmem:[%s9 + $0x5c] sm:$0xf]
        %v1403 = vld [vmem:[%s9 + $0x60] sm:$0xf]
        %v1404 = vld [vmem:[%s9 + $0x64] sm:$0xf]
        %v1405 = vld [vmem:[%s9 + $0x68] sm:$0xf]
        %v1406 = vld [vmem:[%s9 + $0x6c] sm:$0xf]
        %v1407 = vld [vmem:[%s9 + $0x70] sm:$0xf]
        %v1408 = vld [vmem:[%s9 + $0x74] sm:$0xf]
        %v1409 = vld [vmem:[%s9 + $0x78] sm:$0xf]
        %v1410 = vld [vmem:[%s9 + $0x7c] sm:$0xf]
        %v1411 = vld [vmem:[%s10] sm:$0x1]
        %v1413 = vperm.slane %v1411, 0
        %v1447 = vunpack.c.l.b16 %v1379
        %v1448 = vunpack.c.l.b16 %v1380
        %v1449 = vunpack.c.l.b16 %v1381
        %v1450 = vunpack.c.l.b16 %v1382
        %v1451 = vunpack.c.l.b16 %v1383
        %v1452 = vunpack.c.l.b16 %v1384
        %v1453 = vunpack.c.l.b16 %v1385
        %v1454 = vunpack.c.l.b16 %v1386
        %v1455 = vunpack.c.l.b16 %v1387
        %v1456 = vunpack.c.l.b16 %v1388
        %v1457 = vunpack.c.l.b16 %v1389
        %v1458 = vunpack.c.l.b16 %v1390
        %v1459 = vunpack.c.l.b16 %v1391
        %v1460 = vunpack.c.l.b16 %v1392
        %v1461 = vunpack.c.l.b16 %v1393
        %v1462 = vunpack.c.l.b16 %v1394
        %v1463 = vunpack.c.l.b16 %v1395
        %v1464 = vunpack.c.l.b16 %v1396
        %v1465 = vunpack.c.l.b16 %v1397
        %v1466 = vunpack.c.l.b16 %v1398
        %v1467 = vunpack.c.l.b16 %v1399
        %v1468 = vunpack.c.l.b16 %v1400
        %v1469 = vunpack.c.l.b16 %v1401
        %v1470 = vunpack.c.l.b16 %v1402
        %v1471 = vunpack.c.l.b16 %v1403
        %v1472 = vunpack.c.l.b16 %v1404
        %v1473 = vunpack.c.l.b16 %v1405
        %v1474 = vunpack.c.l.b16 %v1406
        %v1475 = vunpack.c.l.b16 %v1407
        %v1476 = vunpack.c.l.b16 %v1408
        %v1477 = vunpack.c.l.b16 %v1409
        %v1478 = vunpack.c.l.b16 %v1410
        %v1479 = vpack.c.b16 %v1448, %v1447
        %v1480 = vpack.c.b16 %v1450, %v1449
        %v1481 = vpack.c.b16 %v1452, %v1451
        %v1482 = vpack.c.b16 %v1454, %v1453
        %v1483 = vpack.c.b16 %v1456, %v1455
        %v1484 = vpack.c.b16 %v1458, %v1457
        %v1485 = vpack.c.b16 %v1460, %v1459
        %v1486 = vpack.c.b16 %v1462, %v1461
        %v1487 = vpack.c.b16 %v1464, %v1463
        %v1488 = vpack.c.b16 %v1466, %v1465
        %v1489 = vpack.c.b16 %v1468, %v1467
        %v1490 = vpack.c.b16 %v1470, %v1469
        %v1491 = vpack.c.b16 %v1472, %v1471
        %v1492 = vpack.c.b16 %v1474, %v1473
        %v1493 = vpack.c.b16 %v1476, %v1475
        %v1494 = vpack.c.b16 %v1478, %v1477
        %1511 = vmatpush.bf16.msra.mxu0 %v1486
        %1512 = vmatpush.bf16.msra.mxu0 %v1485
        %1513 = vmatpush.bf16.msra.mxu0 %v1484
        %1514 = vmatpush.bf16.msra.mxu0 %v1483
        %1515 = vmatpush.bf16.msra.mxu0 %v1482
        %1516 = vmatpush.bf16.msra.mxu0 %v1481
        %1517 = vmatpush.bf16.msra.mxu0 %v1480
        %1518 = vmatpush.bf16.msra.mxu0 %v1479
        %1519 = vmatmul.bf16.gmra.mxu0 %v1377
        %v1520 = vpop.f32.mrf.mxu0
        %v1521 = vadd.f32 %v1413, %v1520
        %v1522 = vpop.f32.mrf.mxu0
        %v1523 = vadd.f32 %v1413, %v1522
        %1524 = vdwg.mxu0
        %1525 = vmatpush.bf16.msra.mxu0 %v1494
        %1526 = vmatpush.bf16.msra.mxu0 %v1493
        %1527 = vmatpush.bf16.msra.mxu0 %v1492
        %1528 = vmatpush.bf16.msra.mxu0 %v1491
        %1529 = vmatpush.bf16.msra.mxu0 %v1490
        %1530 = vmatpush.bf16.msra.mxu0 %v1489
        %1531 = vmatpush.bf16.msra.mxu0 %v1488
        %1532 = vmatpush.bf16.msra.mxu0 %v1487
        %1533 = vmatmul.bf16.gmra.mxu0 %v1378
        %v1534 = vpop.f32.mrf.mxu0
        %v1535 = vadd.f32 %v1521, %v1534
        %v1536 = vpop.f32.mrf.mxu0
        %v1537 = vadd.f32 %v1523, %v1536
        %1538 = vdwg.mxu0
        %v1539 = vadd.f32 %v1535, %v1277
        %v1540 = vadd.f32 %v1537, %v1278
        %1541 = vst.msk [vmem:[%s423] sm:$0xff] %vm487, %v1539
        %1542 = vst.msk [vmem:[%s423 + $0x8] sm:$0xff] %vm487, %v1540
        %s1543 = sand.u32 %s271, 1
        %s1544 = scalar_lea.sflag [#allocation4], %s1543
        %s1545 = sand.u32 %s271, 1
        %s1546 = smul.addr %s1545, 16
        %s1547 = scalar_lea.vmem [#allocation8], %s1546
        // Predicated region
        $region77: #{tpu_custom_call.1} parent=63 // pred_check
          %p1548 = pneg %p281
        $region78: #{tpu_custom_call.1} parent=63 // pred_check_branch
          %1550 = sbr.rel (%p1548) target = $region80
        $region79: #{tpu_custom_call.1} parent=63 // pred_region
          %1552 = vsyncadd %s1544, 0
          %s1553 = smul.addr %s27, 2
          %s1554 = smul.addr %s1553, 8
          %s1555 = scalar_lea.hbm %s11, %s1554
          %s1556 = sshll.u32 %s1547, 4
          %s1557 = int_to_ptr.vmem [resolvable:$true] %s1556
          %s1558 = sshll.u32 %s1555, 4
          %s1559 = int_to_ptr.hbm [resolvable:$true] %s1558
          %1564 = dma.vmem_to_hbm [thread:$0]  %s1557, 256, %s1559, %s1544, 128, 128, 8
        $region80: #{tpu_custom_call.1} parent=63 // pred_fallthru
          _
      $region64: #{tpu_custom_call.1} parent=5 // pred_fallthru
        _
      %p1565 = scmp.le.s32.totalorder 2, %s22
      // Predicated region
      $region81: #{tpu_custom_call.1} parent=5 // pred_check
        %p1566 = pneg %p1565
      $region82: #{tpu_custom_call.1} parent=5 // pred_check_branch
        %1568 = sbr.rel (%p1566) target = $region84
      $region83: #{tpu_custom_call.1} parent=5 // pred_region
        %s1569 = ssub.s32 %s22, 2
        // Predicated region
        $region85: #{tpu_custom_call.1} parent=83 // pred_check
          %p1570 = pneg %p287
        $region86: #{tpu_custom_call.1} parent=83 // pred_check_branch
          %1572 = sbr.rel (%p1570) target = $region88
        $region87: #{tpu_custom_call.1} parent=83 // pred_region
          %s1573 = sand.u32 %s272, 1
          %s1574 = scalar_lea.sflag [#allocation4], %s1573
          %s1575 = sand.u32 %s272, 1
          %s1576 = smul.addr %s1575, 16
          %s1577 = scalar_lea.vmem [#allocation8], %s1576
          %1579 = dma.done %s1574, 256
        $region88: #{tpu_custom_call.1} parent=83 // pred_fallthru
          _
      $region84: #{tpu_custom_call.1} parent=5 // pred_fallthru
        _
    $region6: #{tpu_custom_call.1} parent=1 // loop_footer
      %s26 = sadd.s32 1, %s22
    $region7: #{tpu_custom_call.1} parent=1 // loop_footer_branch
      %21 = sbr.rel target = $region3
    $region8: #{tpu_custom_call.1} parent=1 // loop_exit
      _
    %1580 = vsyncpa [#allocation3], 1
    %s1581 = scalar_lea.sflag [#allocation3], 1
    %1582 = vsyncpa %s1581, 1
    %1583 = vsyncpa [#allocation6], 1
    %1584 = vsyncpa [#allocation4], 1
    %s1585 = scalar_lea.sflag [#allocation4], 1
    %1586 = vsyncpa %s1585, 1

</llo_original>
